<compile_context>
chip_gen: v7x
topology: tpu7x:2x2x1
jax: 0.10.0
libtpu: 0.0.40
codegen_flags: <defaults>
</compile_context>

<pallas_src>
import functools

import jax
import jax.numpy as jnp
from jax import lax
from jax.experimental import pallas as pl
from jax.experimental.pallas import tpu as pltpu

# --- module hyperparameters (consistent with n_embd=64) ---
N_EMBD = 64
NUM_HEADS = 4
HEAD_SIZE = N_EMBD // NUM_HEADS  # 16
BATCH = 2
SEQ = 8  # T <= block_size (500); causal tril mask applied for [:T, :T]
LANE = 128  # padded output width for lane-dense stores


def _mha_kernel(x_ref, wqkv_ref, wp_ref, bp_ref, o_ref,
                *, batch, seq, n_embd, num_heads, head_size):
    # x_ref    : (B*T, C)      flattened input
    # wqkv_ref : (C, 3*C)      [Wq | Wk | Wv] fused
    # wp_ref   : (C, LANE)     output projection, zero-padded to 128 lanes
    # bp_ref   : (1, LANE)     output bias, zero-padded
    # o_ref    : (B*T, LANE)   lane-dense output slab (padding sliced off in wrapper)
    scale = n_embd ** (-0.5)   # PyTorch module scales by C == n_embd (not head_size)

    x = x_ref[...]                                                       # (B*T, C)
    # Single fused QKV projection: one wide MXU push instead of three narrow ones.
    qkv = jnp.dot(x, wqkv_ref[...], preferred_element_type=jnp.float32)  # (B*T, 3C)
    wp = wp_ref[...]                                                     # (C, LANE)
    bias = bp_ref[...]                                                   # (1, LANE)
    lane = o_ref.shape[1]

    # Causal mask, computed once (additive -inf form) and reused everywhere.
    row = lax.broadcasted_iota(jnp.int32, (seq, seq), 0)
    col = lax.broadcasted_iota(jnp.int32, (seq, seq), 1)
    neg_inf_mask = jnp.where(row >= col, 0.0, -jnp.inf).astype(jnp.float32)

    for b in range(batch):                 # static, tiny loops (B=2, H=4)
        r0 = b * seq
        acc = jnp.zeros((seq, lane), dtype=jnp.float32)
        for h in range(num_heads):
            q_lo = h * head_size
            k_lo = n_embd + h * head_size
            v_lo = 2 * n_embd + h * head_size
            qh = qkv[r0:r0 + seq, q_lo:q_lo + head_size]                 # (T, hs)
            kh = qkv[r0:r0 + seq, k_lo:k_lo + head_size]
            vh = qkv[r0:r0 + seq, v_lo:v_lo + head_size]

            # q @ k^T without materializing a transpose: contract last dims.
            wei = lax.dot_general(
                qh, kh,
                dimension_numbers=(((1,), (1,)), ((), ())),
                preferred_element_type=jnp.float32)                      # (T, T)
            wei = wei * scale + neg_inf_mask
            wei = wei - jnp.max(wei, axis=-1, keepdims=True)
            p = jnp.exp(wei)
            # EUP reciprocal + VPU multiply instead of a divide.
            p = p * pl.reciprocal(jnp.sum(p, axis=-1, keepdims=True), approx=True)
            # TODO(synk): training-mode dropout on `p` not implemented (eval no-op).

            hv = jnp.dot(p, vh, preferred_element_type=jnp.float32)      # (T, hs)
            # Accumulate this head's slice of the output projection; no concat.
            acc = acc + jnp.dot(hv, wp[h * head_size:(h + 1) * head_size, :],
                                preferred_element_type=jnp.float32)      # (T, LANE)

        # Lane-dense (128-wide) unmasked store for this batch's rows.
        o_ref[r0:r0 + seq, :] = (acc + bias).astype(o_ref.dtype)


def multi_head_attention(x, wq, wk, wv, w_proj, b_proj,
                         *, num_heads=NUM_HEADS, head_size=HEAD_SIZE):
    B, T, C = x.shape
    assert num_heads * head_size == C

    # Fuse the three projection weights into one (C, 3C) matmul operand.
    w_qkv = jnp.concatenate([wq, wk, wv], axis=1)                        # (C, 3C)
    # Zero-pad the output projection / bias to 128 lanes for a lane-dense epilogue.
    lane = max(LANE, C)
    wp_pad = jnp.zeros((C, lane), x.dtype).at[:, :C].set(w_proj)
    bp_pad = jnp.zeros((1, lane), x.dtype).at[0, :C].set(b_proj)

    x_flat = x.reshape(B * T, C)

    kernel = functools.partial(
        _mha_kernel, batch=B, seq=T, n_embd=C,
        num_heads=num_heads, head_size=head_size)

    vmem = pl.BlockSpec(memory_space=pltpu.MemorySpace.VMEM)
    # Whole problem fits trivially in VMEM on all generations -> single invocation,
    # no grid, no per-step pipelining overhead.
    out_pad = pl.pallas_call(
        kernel,
        out_shape=jax.ShapeDtypeStruct((B * T, lane), x.dtype),
        in_specs=[vmem, vmem, vmem, vmem],
        out_specs=vmem,
    )(x_flat, w_qkv, wp_pad, bp_pad)

    return out_pad[:, :C].reshape(B, T, C)


def _reference(x, wq, wk, wv, w_proj, b_proj, num_heads, head_size):
    B, T, C = x.shape
    scale = C ** (-0.5)
    q = x @ wq
    k = x @ wk
    v = x @ wv
    causal = jnp.tril(jnp.ones((T, T), dtype=bool))
    outs = []
    for h in range(num_heads):
        lo = h * head_size
        qh, kh, vh = (q[..., lo:lo + head_size], k[..., lo:lo + head_size],
                      v[..., lo:lo + head_size])
        wei = jnp.einsum("btd,bsd->bts", qh, kh) * scale
        wei = jnp.where(causal[None], wei, -jnp.inf)
        wei = jax.nn.softmax(wei, axis=-1)
        outs.append(jnp.einsum("bts,bsd->btd", wei, vh))
    cat = jnp.concatenate(outs, axis=-1)
    return cat @ w_proj + b_proj[None, None, :]


if __name__ == "__main__":
    key = jax.random.PRNGKey(0)
    kx, kq, kk, kv, kp, kb = jax.random.split(key, 6)

    x = jax.random.normal(kx, (BATCH, SEQ, N_EMBD), dtype=jnp.float32)

    # nn.Linear(n_embd, head_size, bias=False) per head -> stacked as (C, H*hs)
    # (weights stored already-transposed so the kernel does x @ W)
    s = (1.0 / N_EMBD) ** 0.5
    wq = jax.random.uniform(kq, (N_EMBD, NUM_HEADS * HEAD_SIZE), jnp.float32, -s, s)
    wk = jax.random.uniform(kk, (N_EMBD, NUM_HEADS * HEAD_SIZE), jnp.float32, -s, s)
    wv = jax.random.uniform(kv, (N_EMBD, NUM_HEADS * HEAD_SIZE), jnp.float32, -s, s)
    # nn.Linear(n_embd, n_embd) with bias
    w_proj = jax.random.uniform(kp, (N_EMBD, N_EMBD), jnp.float32, -s, s)
    b_proj = jax.random.uniform(kb, (N_EMBD,), jnp.float32, -s, s)

    out = multi_head_attention(x, wq, wk, wv, w_proj, b_proj)
    out = jax.block_until_ready(out)

    ref = _reference(x, wq, wk, wv, w_proj, b_proj, NUM_HEADS, HEAD_SIZE)
    assert out.shape == (BATCH, SEQ, N_EMBD)
    # approx=True softmax reciprocal gives at most ~1e-4-level differences.
    assert jnp.allclose(out, ref, atol=1e-3, rtol=1e-3), "mismatch vs reference"

    print("KERNEL_OK")
</pallas_src>

<mosaic_0001>
module attributes {stable_mosaic.version = 11 : i64} {
  func.func @_mha_kernel(%arg0: memref<16x64xf32, #tpu.memory_space<vmem>>, %arg1: memref<64x192xf32, #tpu.memory_space<vmem>>, %arg2: memref<64x128xf32, #tpu.memory_space<vmem>>, %arg3: memref<1x128xf32, #tpu.memory_space<vmem>>, %arg4: memref<16x128xf32, #tpu.memory_space<vmem>>) attributes {dimension_semantics = [], scalar_prefetch = 0 : i64, scratch_operands = 0 : i64, tpu.core_type = #tpu.core_type<tc>} {
    %c0 = arith.constant 0 : index
    %c0_0 = arith.constant 0 : index
    %0 = vector.load %arg0[%c0, %c0_0] : memref<16x64xf32, #tpu.memory_space<vmem>>, vector<16x64xf32>
    %c0_1 = arith.constant 0 : index
    %c0_2 = arith.constant 0 : index
    %1 = vector.load %arg1[%c0_1, %c0_2] : memref<64x192xf32, #tpu.memory_space<vmem>>, vector<64x192xf32>
    %cst = arith.constant dense<0.000000e+00> : vector<16x192xf32>
    %2 = tpu.matmul %0, %1, %cst {dimension_numbers = #tpu.dot_dimension_numbers<[1], [0], [0], [1], [0, 0, 1, 1], [], []>} : vector<16x64xf32>, vector<64x192xf32>, vector<16x192xf32> -> vector<16x192xf32>
    %c0_3 = arith.constant 0 : index
    %c0_4 = arith.constant 0 : index
    %3 = vector.load %arg2[%c0_3, %c0_4] : memref<64x128xf32, #tpu.memory_space<vmem>>, vector<64x128xf32>
    %c0_5 = arith.constant 0 : index
    %c0_6 = arith.constant 0 : index
    %4 = vector.load %arg3[%c0_5, %c0_6] : memref<1x128xf32, #tpu.memory_space<vmem>>, vector<1x128xf32>
    %5 = tpu.iota {dimensions = array<i32: 0>} : vector<8x8xi32>
    %6 = tpu.iota {dimensions = array<i32: 1>} : vector<8x8xi32>
    %7 = arith.cmpi sge, %5, %6 : vector<8x8xi32>
    %cst_7 = arith.constant 0.000000e+00 : f32
    %cst_8 = arith.constant 0xFF800000 : f32
    %8 = vector.broadcast %cst_7 : f32 to vector<8x8xf32>
    %9 = vector.broadcast %cst_8 : f32 to vector<8x8xf32>
    %10 = arith.select %7, %8, %9 : vector<8x8xi1>, vector<8x8xf32>
    %cst_9 = arith.constant 0.000000e+00 : f32
    %11 = vector.broadcast %cst_9 : f32 to vector<8x128xf32>
    %12 = vector.extract_strided_slice %2 {offsets = [0, 0], sizes = [8, 16], strides = [1, 1]} : vector<16x192xf32> to vector<8x16xf32>
    %13 = vector.extract_strided_slice %2 {offsets = [0, 64], sizes = [8, 16], strides = [1, 1]} : vector<16x192xf32> to vector<8x16xf32>
    %14 = vector.extract_strided_slice %2 {offsets = [0, 128], sizes = [8, 16], strides = [1, 1]} : vector<16x192xf32> to vector<8x16xf32>
    %cst_10 = arith.constant dense<0.000000e+00> : vector<8x8xf32>
    %15 = tpu.matmul %12, %13, %cst_10 {dimension_numbers = #tpu.dot_dimension_numbers<[1], [1], [0], [0], [0, 0, 1, 0], [], []>} : vector<8x16xf32>, vector<8x16xf32>, vector<8x8xf32> -> vector<8x8xf32>
    %cst_11 = arith.constant 1.250000e-01 : f32
    %16 = vector.broadcast %cst_11 : f32 to vector<8x8xf32>
    %17 = arith.mulf %15, %16 : vector<8x8xf32>
    %18 = arith.addf %17, %10 : vector<8x8xf32>
    %cst_12 = arith.constant dense<0xFF800000> : vector<8xf32>
    %19 = vector.multi_reduction <maximumf>, %18, %cst_12 [1] : vector<8x8xf32> to vector<8xf32>
    %20 = vector.shape_cast %19 : vector<8xf32> to vector<8x1xf32>
    %21 = vector.broadcast %20 : vector<8x1xf32> to vector<8x8xf32>
    %22 = arith.subf %18, %21 : vector<8x8xf32>
    %23 = math.exp %22 : vector<8x8xf32>
    %cst_13 = arith.constant dense<0.000000e+00> : vector<8xf32>
    %24 = vector.multi_reduction <add>, %23, %cst_13 [1] : vector<8x8xf32> to vector<8xf32>
    %25 = vector.shape_cast %24 : vector<8xf32> to vector<8x1xf32>
    %26 = tpu.reciprocal %25 {approx = true} : vector<8x1xf32> -> vector<8x1xf32>
    %27 = vector.broadcast %26 : vector<8x1xf32> to vector<8x8xf32>
    %28 = arith.mulf %23, %27 : vector<8x8xf32>
    %cst_14 = arith.constant dense<0.000000e+00> : vector<8x16xf32>
    %29 = tpu.matmul %28, %14, %cst_14 {dimension_numbers = #tpu.dot_dimension_numbers<[1], [0], [0], [1], [0, 0, 1, 1], [], []>} : vector<8x8xf32>, vector<8x16xf32>, vector<8x16xf32> -> vector<8x16xf32>
    %30 = vector.extract_strided_slice %3 {offsets = [0, 0], sizes = [16, 128], strides = [1, 1]} : vector<64x128xf32> to vector<16x128xf32>
    %cst_15 = arith.constant dense<0.000000e+00> : vector<8x128xf32>
    %31 = tpu.matmul %29, %30, %cst_15 {dimension_numbers = #tpu.dot_dimension_numbers<[1], [0], [0], [1], [0, 0, 1, 1], [], []>} : vector<8x16xf32>, vector<16x128xf32>, vector<8x128xf32> -> vector<8x128xf32>
    %32 = arith.addf %11, %31 : vector<8x128xf32>
    %33 = vector.extract_strided_slice %2 {offsets = [0, 16], sizes = [8, 16], strides = [1, 1]} : vector<16x192xf32> to vector<8x16xf32>
    %34 = vector.extract_strided_slice %2 {offsets = [0, 80], sizes = [8, 16], strides = [1, 1]} : vector<16x192xf32> to vector<8x16xf32>
    %35 = vector.extract_strided_slice %2 {offsets = [0, 144], sizes = [8, 16], strides = [1, 1]} : vector<16x192xf32> to vector<8x16xf32>
    %cst_16 = arith.constant dense<0.000000e+00> : vector<8x8xf32>
    %36 = tpu.matmul %33, %34, %cst_16 {dimension_numbers = #tpu.dot_dimension_numbers<[1], [1], [0], [0], [0, 0, 1, 0], [], []>} : vector<8x16xf32>, vector<8x16xf32>, vector<8x8xf32> -> vector<8x8xf32>
    %cst_17 = arith.constant 1.250000e-01 : f32
    %37 = vector.broadcast %cst_17 : f32 to vector<8x8xf32>
    %38 = arith.mulf %36, %37 : vector<8x8xf32>
    %39 = arith.addf %38, %10 : vector<8x8xf32>
    %cst_18 = arith.constant dense<0xFF800000> : vector<8xf32>
    %40 = vector.multi_reduction <maximumf>, %39, %cst_18 [1] : vector<8x8xf32> to vector<8xf32>
    %41 = vector.shape_cast %40 : vector<8xf32> to vector<8x1xf32>
    %42 = vector.broadcast %41 : vector<8x1xf32> to vector<8x8xf32>
    %43 = arith.subf %39, %42 : vector<8x8xf32>
    %44 = math.exp %43 : vector<8x8xf32>
    %cst_19 = arith.constant dense<0.000000e+00> : vector<8xf32>
    %45 = vector.multi_reduction <add>, %44, %cst_19 [1] : vector<8x8xf32> to vector<8xf32>
    %46 = vector.shape_cast %45 : vector<8xf32> to vector<8x1xf32>
    %47 = tpu.reciprocal %46 {approx = true} : vector<8x1xf32> -> vector<8x1xf32>
    %48 = vector.broadcast %47 : vector<8x1xf32> to vector<8x8xf32>
    %49 = arith.mulf %44, %48 : vector<8x8xf32>
    %cst_20 = arith.constant dense<0.000000e+00> : vector<8x16xf32>
    %50 = tpu.matmul %49, %35, %cst_20 {dimension_numbers = #tpu.dot_dimension_numbers<[1], [0], [0], [1], [0, 0, 1, 1], [], []>} : vector<8x8xf32>, vector<8x16xf32>, vector<8x16xf32> -> vector<8x16xf32>
    %51 = vector.extract_strided_slice %3 {offsets = [16, 0], sizes = [16, 128], strides = [1, 1]} : vector<64x128xf32> to vector<16x128xf32>
    %cst_21 = arith.constant dense<0.000000e+00> : vector<8x128xf32>
    %52 = tpu.matmul %50, %51, %cst_21 {dimension_numbers = #tpu.dot_dimension_numbers<[1], [0], [0], [1], [0, 0, 1, 1], [], []>} : vector<8x16xf32>, vector<16x128xf32>, vector<8x128xf32> -> vector<8x128xf32>
    %53 = arith.addf %32, %52 : vector<8x128xf32>
    %54 = vector.extract_strided_slice %2 {offsets = [0, 32], sizes = [8, 16], strides = [1, 1]} : vector<16x192xf32> to vector<8x16xf32>
    %55 = vector.extract_strided_slice %2 {offsets = [0, 96], sizes = [8, 16], strides = [1, 1]} : vector<16x192xf32> to vector<8x16xf32>
    %56 = vector.extract_strided_slice %2 {offsets = [0, 160], sizes = [8, 16], strides = [1, 1]} : vector<16x192xf32> to vector<8x16xf32>
    %cst_22 = arith.constant dense<0.000000e+00> : vector<8x8xf32>
    %57 = tpu.matmul %54, %55, %cst_22 {dimension_numbers = #tpu.dot_dimension_numbers<[1], [1], [0], [0], [0, 0, 1, 0], [], []>} : vector<8x16xf32>, vector<8x16xf32>, vector<8x8xf32> -> vector<8x8xf32>
    %cst_23 = arith.constant 1.250000e-01 : f32
    %58 = vector.broadcast %cst_23 : f32 to vector<8x8xf32>
    %59 = arith.mulf %57, %58 : vector<8x8xf32>
    %60 = arith.addf %59, %10 : vector<8x8xf32>
    %cst_24 = arith.constant dense<0xFF800000> : vector<8xf32>
    %61 = vector.multi_reduction <maximumf>, %60, %cst_24 [1] : vector<8x8xf32> to vector<8xf32>
    %62 = vector.shape_cast %61 : vector<8xf32> to vector<8x1xf32>
    %63 = vector.broadcast %62 : vector<8x1xf32> to vector<8x8xf32>
    %64 = arith.subf %60, %63 : vector<8x8xf32>
    %65 = math.exp %64 : vector<8x8xf32>
    %cst_25 = arith.constant dense<0.000000e+00> : vector<8xf32>
    %66 = vector.multi_reduction <add>, %65, %cst_25 [1] : vector<8x8xf32> to vector<8xf32>
    %67 = vector.shape_cast %66 : vector<8xf32> to vector<8x1xf32>
    %68 = tpu.reciprocal %67 {approx = true} : vector<8x1xf32> -> vector<8x1xf32>
    %69 = vector.broadcast %68 : vector<8x1xf32> to vector<8x8xf32>
    %70 = arith.mulf %65, %69 : vector<8x8xf32>
    %cst_26 = arith.constant dense<0.000000e+00> : vector<8x16xf32>
    %71 = tpu.matmul %70, %56, %cst_26 {dimension_numbers = #tpu.dot_dimension_numbers<[1], [0], [0], [1], [0, 0, 1, 1], [], []>} : vector<8x8xf32>, vector<8x16xf32>, vector<8x16xf32> -> vector<8x16xf32>
    %72 = vector.extract_strided_slice %3 {offsets = [32, 0], sizes = [16, 128], strides = [1, 1]} : vector<64x128xf32> to vector<16x128xf32>
    %cst_27 = arith.constant dense<0.000000e+00> : vector<8x128xf32>
    %73 = tpu.matmul %71, %72, %cst_27 {dimension_numbers = #tpu.dot_dimension_numbers<[1], [0], [0], [1], [0, 0, 1, 1], [], []>} : vector<8x16xf32>, vector<16x128xf32>, vector<8x128xf32> -> vector<8x128xf32>
    %74 = arith.addf %53, %73 : vector<8x128xf32>
    %75 = vector.extract_strided_slice %2 {offsets = [0, 48], sizes = [8, 16], strides = [1, 1]} : vector<16x192xf32> to vector<8x16xf32>
    %76 = vector.extract_strided_slice %2 {offsets = [0, 112], sizes = [8, 16], strides = [1, 1]} : vector<16x192xf32> to vector<8x16xf32>
    %77 = vector.extract_strided_slice %2 {offsets = [0, 176], sizes = [8, 16], strides = [1, 1]} : vector<16x192xf32> to vector<8x16xf32>
    %cst_28 = arith.constant dense<0.000000e+00> : vector<8x8xf32>
    %78 = tpu.matmul %75, %76, %cst_28 {dimension_numbers = #tpu.dot_dimension_numbers<[1], [1], [0], [0], [0, 0, 1, 0], [], []>} : vector<8x16xf32>, vector<8x16xf32>, vector<8x8xf32> -> vector<8x8xf32>
    %cst_29 = arith.constant 1.250000e-01 : f32
    %79 = vector.broadcast %cst_29 : f32 to vector<8x8xf32>
    %80 = arith.mulf %78, %79 : vector<8x8xf32>
    %81 = arith.addf %80, %10 : vector<8x8xf32>
    %cst_30 = arith.constant dense<0xFF800000> : vector<8xf32>
    %82 = vector.multi_reduction <maximumf>, %81, %cst_30 [1] : vector<8x8xf32> to vector<8xf32>
    %83 = vector.shape_cast %82 : vector<8xf32> to vector<8x1xf32>
    %84 = vector.broadcast %83 : vector<8x1xf32> to vector<8x8xf32>
    %85 = arith.subf %81, %84 : vector<8x8xf32>
    %86 = math.exp %85 : vector<8x8xf32>
    %cst_31 = arith.constant dense<0.000000e+00> : vector<8xf32>
    %87 = vector.multi_reduction <add>, %86, %cst_31 [1] : vector<8x8xf32> to vector<8xf32>
    %88 = vector.shape_cast %87 : vector<8xf32> to vector<8x1xf32>
    %89 = tpu.reciprocal %88 {approx = true} : vector<8x1xf32> -> vector<8x1xf32>
    %90 = vector.broadcast %89 : vector<8x1xf32> to vector<8x8xf32>
    %91 = arith.mulf %86, %90 : vector<8x8xf32>
    %cst_32 = arith.constant dense<0.000000e+00> : vector<8x16xf32>
    %92 = tpu.matmul %91, %77, %cst_32 {dimension_numbers = #tpu.dot_dimension_numbers<[1], [0], [0], [1], [0, 0, 1, 1], [], []>} : vector<8x8xf32>, vector<8x16xf32>, vector<8x16xf32> -> vector<8x16xf32>
    %93 = vector.extract_strided_slice %3 {offsets = [48, 0], sizes = [16, 128], strides = [1, 1]} : vector<64x128xf32> to vector<16x128xf32>
    %cst_33 = arith.constant dense<0.000000e+00> : vector<8x128xf32>
    %94 = tpu.matmul %92, %93, %cst_33 {dimension_numbers = #tpu.dot_dimension_numbers<[1], [0], [0], [1], [0, 0, 1, 1], [], []>} : vector<8x16xf32>, vector<16x128xf32>, vector<8x128xf32> -> vector<8x128xf32>
    %95 = arith.addf %74, %94 : vector<8x128xf32>
    %96 = vector.broadcast %4 : vector<1x128xf32> to vector<8x128xf32>
    %97 = arith.addf %95, %96 : vector<8x128xf32>
    %c0_34 = arith.constant 0 : index
    %c0_35 = arith.constant 0 : index
    %98 = vector.load %arg4[%c0_34, %c0_35] : memref<16x128xf32, #tpu.memory_space<vmem>>, vector<8x128xf32>
    tpu.vector_store %arg4[%c0_34, %c0_35], %97 {strides = array<i32>} : memref<16x128xf32, #tpu.memory_space<vmem>>, vector<8x128xf32>,
    %cst_36 = arith.constant 0.000000e+00 : f32
    %99 = vector.broadcast %cst_36 : f32 to vector<8x128xf32>
    %100 = vector.extract_strided_slice %2 {offsets = [8, 0], sizes = [8, 16], strides = [1, 1]} : vector<16x192xf32> to vector<8x16xf32>
    %101 = vector.extract_strided_slice %2 {offsets = [8, 64], sizes = [8, 16], strides = [1, 1]} : vector<16x192xf32> to vector<8x16xf32>
    %102 = vector.extract_strided_slice %2 {offsets = [8, 128], sizes = [8, 16], strides = [1, 1]} : vector<16x192xf32> to vector<8x16xf32>
    %cst_37 = arith.constant dense<0.000000e+00> : vector<8x8xf32>
    %103 = tpu.matmul %100, %101, %cst_37 {dimension_numbers = #tpu.dot_dimension_numbers<[1], [1], [0], [0], [0, 0, 1, 0], [], []>} : vector<8x16xf32>, vector<8x16xf32>, vector<8x8xf32> -> vector<8x8xf32>
    %cst_38 = arith.constant 1.250000e-01 : f32
    %104 = vector.broadcast %cst_38 : f32 to vector<8x8xf32>
    %105 = arith.mulf %103, %104 : vector<8x8xf32>
    %106 = arith.addf %105, %10 : vector<8x8xf32>
    %cst_39 = arith.constant dense<0xFF800000> : vector<8xf32>
    %107 = vector.multi_reduction <maximumf>, %106, %cst_39 [1] : vector<8x8xf32> to vector<8xf32>
    %108 = vector.shape_cast %107 : vector<8xf32> to vector<8x1xf32>
    %109 = vector.broadcast %108 : vector<8x1xf32> to vector<8x8xf32>
    %110 = arith.subf %106, %109 : vector<8x8xf32>
    %111 = math.exp %110 : vector<8x8xf32>
    %cst_40 = arith.constant dense<0.000000e+00> : vector<8xf32>
    %112 = vector.multi_reduction <add>, %111, %cst_40 [1] : vector<8x8xf32> to vector<8xf32>
    %113 = vector.shape_cast %112 : vector<8xf32> to vector<8x1xf32>
    %114 = tpu.reciprocal %113 {approx = true} : vector<8x1xf32> -> vector<8x1xf32>
    %115 = vector.broadcast %114 : vector<8x1xf32> to vector<8x8xf32>
    %116 = arith.mulf %111, %115 : vector<8x8xf32>
    %cst_41 = arith.constant dense<0.000000e+00> : vector<8x16xf32>
    %117 = tpu.matmul %116, %102, %cst_41 {dimension_numbers = #tpu.dot_dimension_numbers<[1], [0], [0], [1], [0, 0, 1, 1], [], []>} : vector<8x8xf32>, vector<8x16xf32>, vector<8x16xf32> -> vector<8x16xf32>
    %118 = vector.extract_strided_slice %3 {offsets = [0, 0], sizes = [16, 128], strides = [1, 1]} : vector<64x128xf32> to vector<16x128xf32>
    %cst_42 = arith.constant dense<0.000000e+00> : vector<8x128xf32>
    %119 = tpu.matmul %117, %118, %cst_42 {dimension_numbers = #tpu.dot_dimension_numbers<[1], [0], [0], [1], [0, 0, 1, 1], [], []>} : vector<8x16xf32>, vector<16x128xf32>, vector<8x128xf32> -> vector<8x128xf32>
    %120 = arith.addf %99, %119 : vector<8x128xf32>
    %121 = vector.extract_strided_slice %2 {offsets = [8, 16], sizes = [8, 16], strides = [1, 1]} : vector<16x192xf32> to vector<8x16xf32>
    %122 = vector.extract_strided_slice %2 {offsets = [8, 80], sizes = [8, 16], strides = [1, 1]} : vector<16x192xf32> to vector<8x16xf32>
    %123 = vector.extract_strided_slice %2 {offsets = [8, 144], sizes = [8, 16], strides = [1, 1]} : vector<16x192xf32> to vector<8x16xf32>
    %cst_43 = arith.constant dense<0.000000e+00> : vector<8x8xf32>
    %124 = tpu.matmul %121, %122, %cst_43 {dimension_numbers = #tpu.dot_dimension_numbers<[1], [1], [0], [0], [0, 0, 1, 0], [], []>} : vector<8x16xf32>, vector<8x16xf32>, vector<8x8xf32> -> vector<8x8xf32>
    %cst_44 = arith.constant 1.250000e-01 : f32
    %125 = vector.broadcast %cst_44 : f32 to vector<8x8xf32>
    %126 = arith.mulf %124, %125 : vector<8x8xf32>
    %127 = arith.addf %126, %10 : vector<8x8xf32>
    %cst_45 = arith.constant dense<0xFF800000> : vector<8xf32>
    %128 = vector.multi_reduction <maximumf>, %127, %cst_45 [1] : vector<8x8xf32> to vector<8xf32>
    %129 = vector.shape_cast %128 : vector<8xf32> to vector<8x1xf32>
    %130 = vector.broadcast %129 : vector<8x1xf32> to vector<8x8xf32>
    %131 = arith.subf %127, %130 : vector<8x8xf32>
    %132 = math.exp %131 : vector<8x8xf32>
    %cst_46 = arith.constant dense<0.000000e+00> : vector<8xf32>
    %133 = vector.multi_reduction <add>, %132, %cst_46 [1] : vector<8x8xf32> to vector<8xf32>
    %134 = vector.shape_cast %133 : vector<8xf32> to vector<8x1xf32>
    %135 = tpu.reciprocal %134 {approx = true} : vector<8x1xf32> -> vector<8x1xf32>
    %136 = vector.broadcast %135 : vector<8x1xf32> to vector<8x8xf32>
    %137 = arith.mulf %132, %136 : vector<8x8xf32>
    %cst_47 = arith.constant dense<0.000000e+00> : vector<8x16xf32>
    %138 = tpu.matmul %137, %123, %cst_47 {dimension_numbers = #tpu.dot_dimension_numbers<[1], [0], [0], [1], [0, 0, 1, 1], [], []>} : vector<8x8xf32>, vector<8x16xf32>, vector<8x16xf32> -> vector<8x16xf32>
    %139 = vector.extract_strided_slice %3 {offsets = [16, 0], sizes = [16, 128], strides = [1, 1]} : vector<64x128xf32> to vector<16x128xf32>
    %cst_48 = arith.constant dense<0.000000e+00> : vector<8x128xf32>
    %140 = tpu.matmul %138, %139, %cst_48 {dimension_numbers = #tpu.dot_dimension_numbers<[1], [0], [0], [1], [0, 0, 1, 1], [], []>} : vector<8x16xf32>, vector<16x128xf32>, vector<8x128xf32> -> vector<8x128xf32>
    %141 = arith.addf %120, %140 : vector<8x128xf32>
    %142 = vector.extract_strided_slice %2 {offsets = [8, 32], sizes = [8, 16], strides = [1, 1]} : vector<16x192xf32> to vector<8x16xf32>
    %143 = vector.extract_strided_slice %2 {offsets = [8, 96], sizes = [8, 16], strides = [1, 1]} : vector<16x192xf32> to vector<8x16xf32>
    %144 = vector.extract_strided_slice %2 {offsets = [8, 160], sizes = [8, 16], strides = [1, 1]} : vector<16x192xf32> to vector<8x16xf32>
    %cst_49 = arith.constant dense<0.000000e+00> : vector<8x8xf32>
    %145 = tpu.matmul %142, %143, %cst_49 {dimension_numbers = #tpu.dot_dimension_numbers<[1], [1], [0], [0], [0, 0, 1, 0], [], []>} : vector<8x16xf32>, vector<8x16xf32>, vector<8x8xf32> -> vector<8x8xf32>
    %cst_50 = arith.constant 1.250000e-01 : f32
    %146 = vector.broadcast %cst_50 : f32 to vector<8x8xf32>
    %147 = arith.mulf %145, %146 : vector<8x8xf32>
    %148 = arith.addf %147, %10 : vector<8x8xf32>
    %cst_51 = arith.constant dense<0xFF800000> : vector<8xf32>
    %149 = vector.multi_reduction <maximumf>, %148, %cst_51 [1] : vector<8x8xf32> to vector<8xf32>
    %150 = vector.shape_cast %149 : vector<8xf32> to vector<8x1xf32>
    %151 = vector.broadcast %150 : vector<8x1xf32> to vector<8x8xf32>
    %152 = arith.subf %148, %151 : vector<8x8xf32>
    %153 = math.exp %152 : vector<8x8xf32>
    %cst_52 = arith.constant dense<0.000000e+00> : vector<8xf32>
    %154 = vector.multi_reduction <add>, %153, %cst_52 [1] : vector<8x8xf32> to vector<8xf32>
    %155 = vector.shape_cast %154 : vector<8xf32> to vector<8x1xf32>
    %156 = tpu.reciprocal %155 {approx = true} : vector<8x1xf32> -> vector<8x1xf32>
    %157 = vector.broadcast %156 : vector<8x1xf32> to vector<8x8xf32>
    %158 = arith.mulf %153, %157 : vector<8x8xf32>
    %cst_53 = arith.constant dense<0.000000e+00> : vector<8x16xf32>
    %159 = tpu.matmul %158, %144, %cst_53 {dimension_numbers = #tpu.dot_dimension_numbers<[1], [0], [0], [1], [0, 0, 1, 1], [], []>} : vector<8x8xf32>, vector<8x16xf32>, vector<8x16xf32> -> vector<8x16xf32>
    %160 = vector.extract_strided_slice %3 {offsets = [32, 0], sizes = [16, 128], strides = [1, 1]} : vector<64x128xf32> to vector<16x128xf32>
    %cst_54 = arith.constant dense<0.000000e+00> : vector<8x128xf32>
    %161 = tpu.matmul %159, %160, %cst_54 {dimension_numbers = #tpu.dot_dimension_numbers<[1], [0], [0], [1], [0, 0, 1, 1], [], []>} : vector<8x16xf32>, vector<16x128xf32>, vector<8x128xf32> -> vector<8x128xf32>
    %162 = arith.addf %141, %161 : vector<8x128xf32>
    %163 = vector.extract_strided_slice %2 {offsets = [8, 48], sizes = [8, 16], strides = [1, 1]} : vector<16x192xf32> to vector<8x16xf32>
    %164 = vector.extract_strided_slice %2 {offsets = [8, 112], sizes = [8, 16], strides = [1, 1]} : vector<16x192xf32> to vector<8x16xf32>
    %165 = vector.extract_strided_slice %2 {offsets = [8, 176], sizes = [8, 16], strides = [1, 1]} : vector<16x192xf32> to vector<8x16xf32>
    %cst_55 = arith.constant dense<0.000000e+00> : vector<8x8xf32>
    %166 = tpu.matmul %163, %164, %cst_55 {dimension_numbers = #tpu.dot_dimension_numbers<[1], [1], [0], [0], [0, 0, 1, 0], [], []>} : vector<8x16xf32>, vector<8x16xf32>, vector<8x8xf32> -> vector<8x8xf32>
    %cst_56 = arith.constant 1.250000e-01 : f32
    %167 = vector.broadcast %cst_56 : f32 to vector<8x8xf32>
    %168 = arith.mulf %166, %167 : vector<8x8xf32>
    %169 = arith.addf %168, %10 : vector<8x8xf32>
    %cst_57 = arith.constant dense<0xFF800000> : vector<8xf32>
    %170 = vector.multi_reduction <maximumf>, %169, %cst_57 [1] : vector<8x8xf32> to vector<8xf32>
    %171 = vector.shape_cast %170 : vector<8xf32> to vector<8x1xf32>
    %172 = vector.broadcast %171 : vector<8x1xf32> to vector<8x8xf32>
    %173 = arith.subf %169, %172 : vector<8x8xf32>
    %174 = math.exp %173 : vector<8x8xf32>
    %cst_58 = arith.constant dense<0.000000e+00> : vector<8xf32>
    %175 = vector.multi_reduction <add>, %174, %cst_58 [1] : vector<8x8xf32> to vector<8xf32>
    %176 = vector.shape_cast %175 : vector<8xf32> to vector<8x1xf32>
    %177 = tpu.reciprocal %176 {approx = true} : vector<8x1xf32> -> vector<8x1xf32>
    %178 = vector.broadcast %177 : vector<8x1xf32> to vector<8x8xf32>
    %179 = arith.mulf %174, %178 : vector<8x8xf32>
    %cst_59 = arith.constant dense<0.000000e+00> : vector<8x16xf32>
    %180 = tpu.matmul %179, %165, %cst_59 {dimension_numbers = #tpu.dot_dimension_numbers<[1], [0], [0], [1], [0, 0, 1, 1], [], []>} : vector<8x8xf32>, vector<8x16xf32>, vector<8x16xf32> -> vector<8x16xf32>
    %181 = vector.extract_strided_slice %3 {offsets = [48, 0], sizes = [16, 128], strides = [1, 1]} : vector<64x128xf32> to vector<16x128xf32>
    %cst_60 = arith.constant dense<0.000000e+00> : vector<8x128xf32>
    %182 = tpu.matmul %180, %181, %cst_60 {dimension_numbers = #tpu.dot_dimension_numbers<[1], [0], [0], [1], [0, 0, 1, 1], [], []>} : vector<8x16xf32>, vector<16x128xf32>, vector<8x128xf32> -> vector<8x128xf32>
    %183 = arith.addf %162, %182 : vector<8x128xf32>
    %184 = vector.broadcast %4 : vector<1x128xf32> to vector<8x128xf32>
    %185 = arith.addf %183, %184 : vector<8x128xf32>
    %c8 = arith.constant 8 : index
    %c0_61 = arith.constant 0 : index
    %186 = vector.load %arg4[%c8, %c0_61] : memref<16x128xf32, #tpu.memory_space<vmem>>, vector<8x128xf32>
    tpu.vector_store %arg4[%c8, %c0_61], %185 {strides = array<i32>} : memref<16x128xf32, #tpu.memory_space<vmem>>, vector<8x128xf32>,
    return
  }
}

</mosaic_0001>

<llo_original>
// kernel: tpu_custom_call.1
$region0: #{tpu_custom_call.1}
  #allocation0 [shape = 'u32[]', space=smem, size = 0x4, offset = 0x4, fixed_abs, tag = 'smem constant byte address 0x4 - core index']
  #allocation1 [shape = 'u32[144,128]{1,0:T(1,128)}', space=vmem, size = 0x12000, scoped, tag = 'internal scratch']
  %s0 = inlined_call_operand.hbm [shape: f32[16,64], index: 0, kind: input, shape index: {}]
  %s1 = inlined_call_operand.hbm [shape: f32[64,192], index: 1, kind: input, shape index: {}]
  %s2 = inlined_call_operand.hbm [shape: f32[64,128], index: 2, kind: input, shape index: {}]
  %s3 = inlined_call_operand.vmem [shape: f32[1,128], index: 3, kind: input, shape index: {}]
  %s4 = inlined_call_operand.hbm [shape: f32[16,128], index: 4, kind: output, shape index: {}]
  %s5 = sld [smem:[#allocation0]]
  $region38: #{tpu_custom_call.1} parent=0
    _
  %s7 = ssub.s32 1, %s5
  %s8 = scalar_select 0, %s7, %s5
  $region1: #{tpu_custom_call.1} parent=0
    #allocation2 [shape = 'u8[8192]{0}', space=vmem, size = 0x2000, scoped, tag = 'input window, operand 0, single buffered']
    #allocation3 [shape = 's32[1]{0}', space=sflag, size = 0x4, scoped, tag = 'scoped memory for tpu_custom_call.1']
    #allocation4 [shape = 's32[1]{0}', space=sflag, size = 0x4, scoped, tag = 'scoped memory for tpu_custom_call.1']
    #allocation5 [shape = 'u8[65536]{0}', space=vmem, size = 0x10000, scoped, tag = 'input window, operand 1, single buffered']
    #allocation6 [shape = 's32[1]{0}', space=sflag, size = 0x4, scoped, tag = 'scoped memory for tpu_custom_call.1']
    #allocation7 [shape = 'u8[32768]{0}', space=vmem, size = 0x8000, scoped, tag = 'input window, operand 2, single buffered']
    #allocation8 [shape = 'u8[8192]{0}', space=vmem, size = 0x2000, scoped, tag = 'output window, operand 0, single buffered']
    %9 = vsyncpa [#allocation3], 0
    %10 = vsyncpa [#allocation6], 0
    %11 = vsyncpa [#allocation4], 0
    // Predicated region
    $region2: #{tpu_custom_call.1} parent=1 // pred_check
      _
    $region3: #{tpu_custom_call.1} parent=1 // pred_check_branch
      %13 = sbr.rel (0) target = $region5
    $region4: #{tpu_custom_call.1} parent=1 // pred_region
      %s15 = ssub.s32 256, 256
      %16 = vsyncadd [#allocation3], %s15
      %s17 = sshll.u32 [#allocation2], 4
      %s18 = int_to_ptr.vmem [resolvable:$true] %s17
      %23 = dma.hbm_to_vmem [thread:$0]  %s0, 256, %s18, [#allocation3], 128, 128, 8
    $region5: #{tpu_custom_call.1} parent=1 // pred_fallthru
      _
    // Predicated region
    $region6: #{tpu_custom_call.1} parent=1 // pred_check
      _
    $region7: #{tpu_custom_call.1} parent=1 // pred_check_branch
      %25 = sbr.rel (0) target = $region9
    $region8: #{tpu_custom_call.1} parent=1 // pred_region
      %s27 = ssub.s32 2048, 2048
      %28 = vsyncadd [#allocation6], %s27
      %s29 = sshll.u32 [#allocation5], 4
      %s30 = int_to_ptr.vmem [resolvable:$true] %s29
      %35 = dma.hbm_to_vmem [thread:$0]  %s1, 2048, %s30, [#allocation6], 256, 256, 16
    $region9: #{tpu_custom_call.1} parent=1 // pred_fallthru
      _
    // Predicated region
    $region10: #{tpu_custom_call.1} parent=1 // pred_check
      _
    $region11: #{tpu_custom_call.1} parent=1 // pred_check_branch
      %37 = sbr.rel (0) target = $region13
    $region12: #{tpu_custom_call.1} parent=1 // pred_region
      %s39 = ssub.s32 1024, 1024
      %40 = vsyncadd [#allocation6], %s39
      %s41 = sshll.u32 [#allocation7], 4
      %s42 = int_to_ptr.vmem [resolvable:$true] %s41
      %47 = dma.hbm_to_vmem [thread:$0]  %s2, 1024, %s42, [#allocation6], 128, 128, 8
    $region13: #{tpu_custom_call.1} parent=1 // pred_fallthru
      _
    // Predicated region
    $region14: #{tpu_custom_call.1} parent=1 // pred_check
      _
    $region15: #{tpu_custom_call.1} parent=1 // pred_check_branch
      %49 = sbr.rel (0) target = $region17
    $region16: #{tpu_custom_call.1} parent=1 // pred_region
      _
    $region17: #{tpu_custom_call.1} parent=1 // pred_fallthru
      _
    // Predicated region
    $region18: #{tpu_custom_call.1} parent=1 // pred_check
      _
    $region19: #{tpu_custom_call.1} parent=1 // pred_check_branch
      %51 = sbr.rel (0) target = $region21
    $region20: #{tpu_custom_call.1} parent=1 // pred_region
      %52 = dma.done [#allocation3], 256
    $region21: #{tpu_custom_call.1} parent=1 // pred_fallthru
      _
    // Predicated region
    $region22: #{tpu_custom_call.1} parent=1 // pred_check
      _
    $region23: #{tpu_custom_call.1} parent=1 // pred_check_branch
      %54 = sbr.rel (0) target = $region25
    $region24: #{tpu_custom_call.1} parent=1 // pred_region
      %55 = dma.done [#allocation6], 2048
    $region25: #{tpu_custom_call.1} parent=1 // pred_fallthru
      _
    // Predicated region
    $region26: #{tpu_custom_call.1} parent=1 // pred_check
      _
    $region27: #{tpu_custom_call.1} parent=1 // pred_check_branch
      %57 = sbr.rel (0) target = $region29
    $region28: #{tpu_custom_call.1} parent=1 // pred_region
      %58 = dma.done [#allocation6], 1024
    $region29: #{tpu_custom_call.1} parent=1 // pred_fallthru
      _
    %v59 = vld [vmem:[#allocation2] sm:$0xff]
    %v60 = vld [vmem:[#allocation2 + $0x8] sm:$0xff]
    %v61 = vld [vmem:[#allocation5] sm:$0xff]
    %v62 = vld [vmem:[#allocation5 + $0x8] sm:$0xff]
    %v63 = vld [vmem:[#allocation5 + $0x10] sm:$0xff]
    %v64 = vld [vmem:[#allocation5 + $0x18] sm:$0xff]
    %v65 = vld [vmem:[#allocation5 + $0x20] sm:$0xff]
    %v66 = vld [vmem:[#allocation5 + $0x28] sm:$0xff]
    %v67 = vld [vmem:[#allocation5 + $0x30] sm:$0xff]
    %v68 = vld [vmem:[#allocation5 + $0x38] sm:$0xff]
    %v69 = vld [vmem:[#allocation5 + $0x40] sm:$0xff]
    %v70 = vld [vmem:[#allocation5 + $0x48] sm:$0xff]
    %v71 = vld [vmem:[#allocation5 + $0x50] sm:$0xff]
    %v72 = vld [vmem:[#allocation5 + $0x58] sm:$0xff]
    %v73 = vld [vmem:[#allocation5 + $0x60] sm:$0xff]
    %v74 = vld [vmem:[#allocation5 + $0x68] sm:$0xff]
    %v75 = vld [vmem:[#allocation5 + $0x70] sm:$0xff]
    %v76 = vld [vmem:[#allocation5 + $0x78] sm:$0xff]
    %vm77 = vcmask 523264
    %v79 = vsel %vm77, %v59, 0
    %v82 = vsel %vm77, %v60, 0
    %84 = vmatprep.subr.mxu0 %v62
    %85 = vmatpush1.msra.mxu0 %v61
    %86 = vmatprep.subr.mxu0 %v64
    %87 = vmatpush1.msra.mxu0 %v63
    %88 = vmatprep.subr.mxu0 %v66
    %89 = vmatpush1.msra.mxu0 %v65
    %90 = vmatprep.subr.mxu0 %v68
    %91 = vmatpush1.msra.mxu0 %v67
    %92 = vmatprep.subr.mxu0 %v70
    %93 = vmatpush1.msra.mxu0 %v69
    %94 = vmatprep.subr.mxu0 %v72
    %95 = vmatpush1.msra.mxu0 %v71
    %96 = vmatprep.subr.mxu0 %v74
    %97 = vmatpush1.msra.mxu0 %v73
    %98 = vmatprep.subr.mxu0 %v76
    %99 = vmatpush1.msra.mxu0 %v75
    %100 = vmatprep.subr.mxu0 0.0
    %101 = vmatpush1.msra.mxu0 0.0
    %102 = vmatprep.subr.mxu0 0.0
    %103 = vmatpush1.msra.mxu0 0.0
    %104 = vmatprep.subr.mxu0 0.0
    %105 = vmatpush1.msra.mxu0 0.0
    %106 = vmatprep.subr.mxu0 0.0
    %107 = vmatpush1.msra.mxu0 0.0
    %108 = vmatprep.subr.mxu0 0.0
    %109 = vmatpush1.msra.mxu0 0.0
    %110 = vmatprep.subr.mxu0 0.0
    %111 = vmatpush1.msra.mxu0 0.0
    %112 = vmatprep.subr.mxu0 0.0
    %113 = vmatpush1.msra.mxu0 0.0
    %114 = vmatprep.subr.mxu0 0.0
    %115 = vmatpush1.msra.mxu0 0.0
    %116 = vmatprep.subr.mxu0 0.0
    %117 = vmatpush1.msra.mxu0 0.0
    %118 = vmatprep.subr.mxu0 0.0
    %119 = vmatpush1.msra.mxu0 0.0
    %120 = vmatprep.subr.mxu0 0.0
    %121 = vmatpush1.msra.mxu0 0.0
    %122 = vmatprep.subr.mxu0 0.0
    %123 = vmatpush1.msra.mxu0 0.0
    %124 = vmatprep.subr.mxu0 0.0
    %125 = vmatpush1.msra.mxu0 0.0
    %126 = vmatprep.subr.mxu0 0.0
    %127 = vmatpush1.msra.mxu0 0.0
    %128 = vmatprep.subr.mxu0 0.0
    %129 = vmatpush1.msra.mxu0 0.0
    %130 = vmatprep.subr.mxu0 0.0
    %131 = vmatpush1.msra.mxu0 0.0
    %132 = vmatprep.subr.mxu0 0.0
    %133 = vmatpush1.msra.mxu0 0.0
    %134 = vmatprep.subr.mxu0 0.0
    %135 = vmatpush1.msra.mxu0 0.0
    %136 = vmatprep.subr.mxu0 0.0
    %137 = vmatpush1.msra.mxu0 0.0
    %138 = vmatprep.subr.mxu0 0.0
    %139 = vmatpush1.msra.mxu0 0.0
    %140 = vmatprep.subr.mxu0 0.0
    %141 = vmatpush1.msra.mxu0 0.0
    %142 = vmatprep.subr.mxu0 0.0
    %143 = vmatpush1.msra.mxu0 0.0
    %144 = vmatprep.subr.mxu0 0.0
    %145 = vmatpush1.msra.mxu0 0.0
    %146 = vmatprep.subr.mxu0 0.0
    %147 = vmatpush1.msra.mxu0 0.0
    %148 = vmatprep.mubr.f32.mxu0 0.0
    %149 = vmatmul.mubr.f32.gmra.mrb[0].mxu0 %v79
    %v150 = vpop.f32.mrb[0].mxu0
    %v151 = vadd.f32 0.0, %v150
    %v152 = vpop.f32.mrb[0].mxu0
    %v153 = vadd.f32 0.0, %v152
    %154 = vmatprep.mubr.f32.mxu0 0.0
    %155 = vmatmul.mubr.f32.gmra.mrb[0].mxu0 %v82
    %v156 = vpop.f32.mrb[0].mxu0
    %v157 = vadd.f32 0.0, %v156
    %v158 = vpop.f32.mrb[0].mxu0
    %v159 = vadd.f32 0.0, %v158
    %160 = vdwg.mxu0
    %v161 = vld [vmem:[#allocation7] sm:$0xff]
    %v162 = vld [vmem:[#allocation7 + $0x8] sm:$0xff]
    %v163 = vld [vmem:[#allocation7 + $0x10] sm:$0xff]
    %v164 = vld [vmem:[#allocation7 + $0x18] sm:$0xff]
    %v165 = vld [vmem:[#allocation7 + $0x20] sm:$0xff]
    %v166 = vld [vmem:[#allocation7 + $0x28] sm:$0xff]
    %v167 = vld [vmem:[#allocation7 + $0x30] sm:$0xff]
    %v168 = vld [vmem:[#allocation7 + $0x38] sm:$0xff]
    %v169 = vld [vmem:[%s3] sm:$0x1]
    %v170 = vlaneseq
    %v171 = vshrl.u32 %v170, 7
    %v172 = vlaneseq
    %v173 = vand.u32 %v172, 127
    %vm174 = vcmp.ge.s32.totalorder %v171, %v173
    %v175 = vsel %vm174, 0.0, -inf
    %177 = vrot.lane.b32.xlu0 %v151, 64
    %v178 = vpop.permute.xlu0 %177
    %vm179 = vcmask 130048
    %v180 = vsel %vm179, %v151, 0
    %v182 = vsel %vm179, %v178, 0
    %184 = vmatprep.subr.mxu0 0.0
    %185 = vmatpush1.xpose.msra.mxu0 %v182
    %186 = vmatprep.subr.mxu0 0.0
    %187 = vmatpush1.xpose.msra.mxu0 0.0
    %188 = vmatprep.subr.mxu0 0.0
    %189 = vmatpush1.xpose.msra.mxu0 0.0
    %190 = vmatprep.subr.mxu0 0.0
    %191 = vmatpush1.xpose.msra.mxu0 0.0
    %192 = vmatprep.subr.mxu0 0.0
    %193 = vmatpush1.xpose.msra.mxu0 0.0
    %194 = vmatprep.subr.mxu0 0.0
    %195 = vmatpush1.xpose.msra.mxu0 0.0
    %196 = vmatprep.subr.mxu0 0.0
    %197 = vmatpush1.xpose.msra.mxu0 0.0
    %198 = vmatprep.subr.mxu0 0.0
    %199 = vmatpush1.xpose.msra.mxu0 0.0
    %200 = vmatprep.subr.mxu0 0.0
    %201 = vmatpush1.xpose.msra.mxu0 0.0
    %202 = vmatprep.subr.mxu0 0.0
    %203 = vmatpush1.xpose.msra.mxu0 0.0
    %204 = vmatprep.subr.mxu0 0.0
    %205 = vmatpush1.xpose.msra.mxu0 0.0
    %206 = vmatprep.subr.mxu0 0.0
    %207 = vmatpush1.xpose.msra.mxu0 0.0
    %208 = vmatprep.subr.mxu0 0.0
    %209 = vmatpush1.xpose.msra.mxu0 0.0
    %210 = vmatprep.subr.mxu0 0.0
    %211 = vmatpush1.xpose.msra.mxu0 0.0
    %212 = vmatprep.subr.mxu0 0.0
    %213 = vmatpush1.xpose.msra.mxu0 0.0
    %214 = vmatprep.subr.mxu0 0.0
    %215 = vmatpush1.xpose.msra.mxu0 0.0
    %216 = vmatprep.subr.mxu0 0.0
    %217 = vmatpush1.xpose.msra.mxu0 0.0
    %218 = vmatprep.subr.mxu0 0.0
    %219 = vmatpush1.xpose.msra.mxu0 0.0
    %220 = vmatprep.subr.mxu0 0.0
    %221 = vmatpush1.xpose.msra.mxu0 0.0
    %222 = vmatprep.subr.mxu0 0.0
    %223 = vmatpush1.xpose.msra.mxu0 0.0
    %224 = vmatprep.subr.mxu0 0.0
    %225 = vmatpush1.xpose.msra.mxu0 0.0
    %226 = vmatprep.subr.mxu0 0.0
    %227 = vmatpush1.xpose.msra.mxu0 0.0
    %228 = vmatprep.subr.mxu0 0.0
    %229 = vmatpush1.xpose.msra.mxu0 0.0
    %230 = vmatprep.subr.mxu0 0.0
    %231 = vmatpush1.xpose.msra.mxu0 0.0
    %232 = vmatprep.subr.mxu0 0.0
    %233 = vmatpush1.xpose.msra.mxu0 0.0
    %234 = vmatprep.subr.mxu0 0.0
    %235 = vmatpush1.xpose.msra.mxu0 0.0
    %236 = vmatprep.subr.mxu0 0.0
    %237 = vmatpush1.xpose.msra.mxu0 0.0
    %238 = vmatprep.subr.mxu0 0.0
    %239 = vmatpush1.xpose.msra.mxu0 0.0
    %240 = vmatprep.subr.mxu0 0.0
    %241 = vmatpush1.xpose.msra.mxu0 0.0
    %242 = vmatprep.subr.mxu0 0.0
    %243 = vmatpush1.xpose.msra.mxu0 0.0
    %244 = vmatprep.subr.mxu0 0.0
    %245 = vmatpush1.xpose.msra.mxu0 0.0
    %246 = vmatprep.subr.mxu0 0.0
    %247 = vmatpush1.xpose.msra.mxu0 0.0
    %248 = vmatprep.mubr.f32.mxu0 0.0
    %249 = vmatmul.mubr.f32.gmra.mrb[0].mxu0 %v180
    %v250 = vpop.f32.mrb[0].mxu0
    %v251 = vadd.f32 0.0, %v250
    %v252 = vpop.f32.mrb[0].mxu0
    %253 = vdwg.mxu0
    %v254 = vmul.f32 %v251, 0.125
    %v255 = vadd.f32 %v254, %v175
    %vm256 = vcmask 64512
    %v257 = vsel %vm256, %v255, -inf
    %258 = vmax.xlane.f32.xlu0 %v257
    %v259 = vpop.xlane.xlu0 %258
    %v260 = vsub.f32 %v255, %v259
    %v261 = vmul.f32 %v260, 1.442695
    %v262 = vpow.pop %v261
    %v263 = vsel %vm256, %v262, 0.0
    %264 = vadd.xlane.f32.xlu0 %v263
    %v265 = vpop.xlane.xlu0 %264
    %v266 = vrcp.pop %v265
    %v267 = vmul.f32 %v262, %v266
    %v269 = vsel %vm256, %v267, 0
    %271 = vmatprep.subr.mxu0 0.0
    %272 = vmatpush1.msra.mxu0 %v153
    %273 = vmatprep.subr.mxu0 0.0
    %274 = vmatpush1.msra.mxu0 0.0
    %275 = vmatprep.subr.mxu0 0.0
    %276 = vmatpush1.msra.mxu0 0.0
    %277 = vmatprep.subr.mxu0 0.0
    %278 = vmatpush1.msra.mxu0 0.0
    %279 = vmatprep.subr.mxu0 0.0
    %280 = vmatpush1.msra.mxu0 0.0
    %281 = vmatprep.subr.mxu0 0.0
    %282 = vmatpush1.msra.mxu0 0.0
    %283 = vmatprep.subr.mxu0 0.0
    %284 = vmatpush1.msra.mxu0 0.0
    %285 = vmatprep.subr.mxu0 0.0
    %286 = vmatpush1.msra.mxu0 0.0
    %287 = vmatprep.subr.mxu0 0.0
    %288 = vmatpush1.msra.mxu0 0.0
    %289 = vmatprep.subr.mxu0 0.0
    %290 = vmatpush1.msra.mxu0 0.0
    %291 = vmatprep.subr.mxu0 0.0
    %292 = vmatpush1.msra.mxu0 0.0
    %293 = vmatprep.subr.mxu0 0.0
    %294 = vmatpush1.msra.mxu0 0.0
    %295 = vmatprep.subr.mxu0 0.0
    %296 = vmatpush1.msra.mxu0 0.0
    %297 = vmatprep.subr.mxu0 0.0
    %298 = vmatpush1.msra.mxu0 0.0
    %299 = vmatprep.subr.mxu0 0.0
    %300 = vmatpush1.msra.mxu0 0.0
    %301 = vmatprep.subr.mxu0 0.0
    %302 = vmatpush1.msra.mxu0 0.0
    %303 = vmatprep.subr.mxu0 0.0
    %304 = vmatpush1.msra.mxu0 0.0
    %305 = vmatprep.subr.mxu0 0.0
    %306 = vmatpush1.msra.mxu0 0.0
    %307 = vmatprep.subr.mxu0 0.0
    %308 = vmatpush1.msra.mxu0 0.0
    %309 = vmatprep.subr.mxu0 0.0
    %310 = vmatpush1.msra.mxu0 0.0
    %311 = vmatprep.subr.mxu0 0.0
    %312 = vmatpush1.msra.mxu0 0.0
    %313 = vmatprep.subr.mxu0 0.0
    %314 = vmatpush1.msra.mxu0 0.0
    %315 = vmatprep.subr.mxu0 0.0
    %316 = vmatpush1.msra.mxu0 0.0
    %317 = vmatprep.subr.mxu0 0.0
    %318 = vmatpush1.msra.mxu0 0.0
    %319 = vmatprep.subr.mxu0 0.0
    %320 = vmatpush1.msra.mxu0 0.0
    %321 = vmatprep.subr.mxu0 0.0
    %322 = vmatpush1.msra.mxu0 0.0
    %323 = vmatprep.subr.mxu0 0.0
    %324 = vmatpush1.msra.mxu0 0.0
    %325 = vmatprep.subr.mxu0 0.0
    %326 = vmatpush1.msra.mxu0 0.0
    %327 = vmatprep.subr.mxu0 0.0
    %328 = vmatpush1.msra.mxu0 0.0
    %329 = vmatprep.subr.mxu0 0.0
    %330 = vmatpush1.msra.mxu0 0.0
    %331 = vmatprep.subr.mxu0 0.0
    %332 = vmatpush1.msra.mxu0 0.0
    %333 = vmatprep.subr.mxu0 0.0
    %334 = vmatpush1.msra.mxu0 0.0
    %335 = vmatprep.mubr.f32.mxu0 0.0
    %336 = vmatmul.mubr.f32.gmra.mrb[0].mxu0 %v269
    %v337 = vpop.f32.mrb[0].mxu0
    %v338 = vadd.f32 0.0, %v337
    %v339 = vpop.f32.mrb[0].mxu0
    %340 = vdwg.mxu0
    %341 = vrot.lane.b32.xlu0 %v151, 112
    %v342 = vpop.permute.xlu0 %341
    %343 = vrot.lane.b32.xlu0 %v151, 48
    %v344 = vpop.permute.xlu0 %343
    %v345 = vsel %vm179, %v342, 0
    %v347 = vsel %vm179, %v344, 0
    %349 = vmatprep.subr.mxu0 0.0
    %350 = vmatpush1.xpose.msra.mxu0 %v347
    %351 = vmatprep.subr.mxu0 0.0
    %352 = vmatpush1.xpose.msra.mxu0 0.0
    %353 = vmatprep.subr.mxu0 0.0
    %354 = vmatpush1.xpose.msra.mxu0 0.0
    %355 = vmatprep.subr.mxu0 0.0
    %356 = vmatpush1.xpose.msra.mxu0 0.0
    %357 = vmatprep.subr.mxu0 0.0
    %358 = vmatpush1.xpose.msra.mxu0 0.0
    %359 = vmatprep.subr.mxu0 0.0
    %360 = vmatpush1.xpose.msra.mxu0 0.0
    %361 = vmatprep.subr.mxu0 0.0
    %362 = vmatpush1.xpose.msra.mxu0 0.0
    %363 = vmatprep.subr.mxu0 0.0
    %364 = vmatpush1.xpose.msra.mxu0 0.0
    %365 = vmatprep.subr.mxu0 0.0
    %366 = vmatpush1.xpose.msra.mxu0 0.0
    %367 = vmatprep.subr.mxu0 0.0
    %368 = vmatpush1.xpose.msra.mxu0 0.0
    %369 = vmatprep.subr.mxu0 0.0
    %370 = vmatpush1.xpose.msra.mxu0 0.0
    %371 = vmatprep.subr.mxu0 0.0
    %372 = vmatpush1.xpose.msra.mxu0 0.0
    %373 = vmatprep.subr.mxu0 0.0
    %374 = vmatpush1.xpose.msra.mxu0 0.0
    %375 = vmatprep.subr.mxu0 0.0
    %376 = vmatpush1.xpose.msra.mxu0 0.0
    %377 = vmatprep.subr.mxu0 0.0
    %378 = vmatpush1.xpose.msra.mxu0 0.0
    %379 = vmatprep.subr.mxu0 0.0
    %380 = vmatpush1.xpose.msra.mxu0 0.0
    %381 = vmatprep.subr.mxu0 0.0
    %382 = vmatpush1.xpose.msra.mxu0 0.0
    %383 = vmatprep.subr.mxu0 0.0
    %384 = vmatpush1.xpose.msra.mxu0 0.0
    %385 = vmatprep.subr.mxu0 0.0
    %386 = vmatpush1.xpose.msra.mxu0 0.0
    %387 = vmatprep.subr.mxu0 0.0
    %388 = vmatpush1.xpose.msra.mxu0 0.0
    %389 = vmatprep.subr.mxu0 0.0
    %390 = vmatpush1.xpose.msra.mxu0 0.0
    %391 = vmatprep.subr.mxu0 0.0
    %392 = vmatpush1.xpose.msra.mxu0 0.0
    %393 = vmatprep.subr.mxu0 0.0
    %394 = vmatpush1.xpose.msra.mxu0 0.0
    %395 = vmatprep.subr.mxu0 0.0
    %396 = vmatpush1.xpose.msra.mxu0 0.0
    %397 = vmatprep.subr.mxu0 0.0
    %398 = vmatpush1.xpose.msra.mxu0 0.0
    %399 = vmatprep.subr.mxu0 0.0
    %400 = vmatpush1.xpose.msra.mxu0 0.0
    %401 = vmatprep.subr.mxu0 0.0
    %402 = vmatpush1.xpose.msra.mxu0 0.0
    %403 = vmatprep.subr.mxu0 0.0
    %404 = vmatpush1.xpose.msra.mxu0 0.0
    %405 = vmatprep.subr.mxu0 0.0
    %406 = vmatpush1.xpose.msra.mxu0 0.0
    %407 = vmatprep.subr.mxu0 0.0
    %408 = vmatpush1.xpose.msra.mxu0 0.0
    %409 = vmatprep.subr.mxu0 0.0
    %410 = vmatpush1.xpose.msra.mxu0 0.0
    %411 = vmatprep.subr.mxu0 0.0
    %412 = vmatpush1.xpose.msra.mxu0 0.0
    %413 = vmatprep.mubr.f32.mxu0 0.0
    %414 = vmatmul.mubr.f32.gmra.mrb[0].mxu0 %v345
    %v415 = vpop.f32.mrb[0].mxu0
    %v416 = vadd.f32 0.0, %v415
    %v417 = vpop.f32.mrb[0].mxu0
    %418 = vdwg.mxu0
    %v419 = vmul.f32 %v416, 0.125
    %v420 = vadd.f32 %v419, %v175
    %v421 = vsel %vm256, %v420, -inf
    %422 = vmax.xlane.f32.xlu0 %v421
    %v423 = vpop.xlane.xlu0 %422
    %v424 = vsub.f32 %v420, %v423
    %v425 = vmul.f32 %v424, 1.442695
    %v426 = vpow.pop %v425
    %v427 = vsel %vm256, %v426, 0.0
    %428 = vadd.xlane.f32.xlu0 %v427
    %v429 = vpop.xlane.xlu0 %428
    %v430 = vrcp.pop %v429
    %v431 = vmul.f32 %v426, %v430
    %433 = vrot.lane.b32.xlu0 %v153, 112
    %v434 = vpop.permute.xlu0 %433
    %v437 = vsel %vm256, %v431, 0
    %439 = vmatprep.subr.mxu0 0.0
    %440 = vmatpush1.msra.mxu0 %v434
    %441 = vmatprep.subr.mxu0 0.0
    %442 = vmatpush1.msra.mxu0 0.0
    %443 = vmatprep.subr.mxu0 0.0
    %444 = vmatpush1.msra.mxu0 0.0
    %445 = vmatprep.subr.mxu0 0.0
    %446 = vmatpush1.msra.mxu0 0.0
    %447 = vmatprep.subr.mxu0 0.0
    %448 = vmatpush1.msra.mxu0 0.0
    %449 = vmatprep.subr.mxu0 0.0
    %450 = vmatpush1.msra.mxu0 0.0
    %451 = vmatprep.subr.mxu0 0.0
    %452 = vmatpush1.msra.mxu0 0.0
    %453 = vmatprep.subr.mxu0 0.0
    %454 = vmatpush1.msra.mxu0 0.0
    %455 = vmatprep.subr.mxu0 0.0
    %456 = vmatpush1.msra.mxu0 0.0
    %457 = vmatprep.subr.mxu0 0.0
    %458 = vmatpush1.msra.mxu0 0.0
    %459 = vmatprep.subr.mxu0 0.0
    %460 = vmatpush1.msra.mxu0 0.0
    %461 = vmatprep.subr.mxu0 0.0
    %462 = vmatpush1.msra.mxu0 0.0
    %463 = vmatprep.subr.mxu0 0.0
    %464 = vmatpush1.msra.mxu0 0.0
    %465 = vmatprep.subr.mxu0 0.0
    %466 = vmatpush1.msra.mxu0 0.0
    %467 = vmatprep.subr.mxu0 0.0
    %468 = vmatpush1.msra.mxu0 0.0
    %469 = vmatprep.subr.mxu0 0.0
    %470 = vmatpush1.msra.mxu0 0.0
    %471 = vmatprep.subr.mxu0 0.0
    %472 = vmatpush1.msra.mxu0 0.0
    %473 = vmatprep.subr.mxu0 0.0
    %474 = vmatpush1.msra.mxu0 0.0
    %475 = vmatprep.subr.mxu0 0.0
    %476 = vmatpush1.msra.mxu0 0.0
    %477 = vmatprep.subr.mxu0 0.0
    %478 = vmatpush1.msra.mxu0 0.0
    %479 = vmatprep.subr.mxu0 0.0
    %480 = vmatpush1.msra.mxu0 0.0
    %481 = vmatprep.subr.mxu0 0.0
    %482 = vmatpush1.msra.mxu0 0.0
    %483 = vmatprep.subr.mxu0 0.0
    %484 = vmatpush1.msra.mxu0 0.0
    %485 = vmatprep.subr.mxu0 0.0
    %486 = vmatpush1.msra.mxu0 0.0
    %487 = vmatprep.subr.mxu0 0.0
    %488 = vmatpush1.msra.mxu0 0.0
    %489 = vmatprep.subr.mxu0 0.0
    %490 = vmatpush1.msra.mxu0 0.0
    %491 = vmatprep.subr.mxu0 0.0
    %492 = vmatpush1.msra.mxu0 0.0
    %493 = vmatprep.subr.mxu0 0.0
    %494 = vmatpush1.msra.mxu0 0.0
    %495 = vmatprep.subr.mxu0 0.0
    %496 = vmatpush1.msra.mxu0 0.0
    %497 = vmatprep.subr.mxu0 0.0
    %498 = vmatpush1.msra.mxu0 0.0
    %499 = vmatprep.subr.mxu0 0.0
    %500 = vmatpush1.msra.mxu0 0.0
    %501 = vmatprep.subr.mxu0 0.0
    %502 = vmatpush1.msra.mxu0 0.0
    %503 = vmatprep.mubr.f32.mxu0 0.0
    %504 = vmatmul.mubr.f32.gmra.mrb[0].mxu0 %v437
    %v505 = vpop.f32.mrb[0].mxu0
    %v506 = vadd.f32 0.0, %v505
    %v507 = vpop.f32.mrb[0].mxu0
    %508 = vdwg.mxu0
    %v510 = vsel %vm179, %v506, 0
    %512 = vmatprep.subr.mxu0 0.0
    %513 = vmatpush1.msra.mxu0 %v163
    %514 = vmatprep.subr.mxu0 0.0
    %515 = vmatpush1.msra.mxu0 %v164
    %516 = vmatprep.subr.mxu0 0.0
    %517 = vmatpush1.msra.mxu0 0.0
    %518 = vmatprep.subr.mxu0 0.0
    %519 = vmatpush1.msra.mxu0 0.0
    %520 = vmatprep.subr.mxu0 0.0
    %521 = vmatpush1.msra.mxu0 0.0
    %522 = vmatprep.subr.mxu0 0.0
    %523 = vmatpush1.msra.mxu0 0.0
    %524 = vmatprep.subr.mxu0 0.0
    %525 = vmatpush1.msra.mxu0 0.0
    %526 = vmatprep.subr.mxu0 0.0
    %527 = vmatpush1.msra.mxu0 0.0
    %528 = vmatprep.subr.mxu0 0.0
    %529 = vmatpush1.msra.mxu0 0.0
    %530 = vmatprep.subr.mxu0 0.0
    %531 = vmatpush1.msra.mxu0 0.0
    %532 = vmatprep.subr.mxu0 0.0
    %533 = vmatpush1.msra.mxu0 0.0
    %534 = vmatprep.subr.mxu0 0.0
    %535 = vmatpush1.msra.mxu0 0.0
    %536 = vmatprep.subr.mxu0 0.0
    %537 = vmatpush1.msra.mxu0 0.0
    %538 = vmatprep.subr.mxu0 0.0
    %539 = vmatpush1.msra.mxu0 0.0
    %540 = vmatprep.subr.mxu0 0.0
    %541 = vmatpush1.msra.mxu0 0.0
    %542 = vmatprep.subr.mxu0 0.0
    %543 = vmatpush1.msra.mxu0 0.0
    %544 = vmatprep.subr.mxu0 0.0
    %545 = vmatpush1.msra.mxu0 0.0
    %546 = vmatprep.subr.mxu0 0.0
    %547 = vmatpush1.msra.mxu0 0.0
    %548 = vmatprep.subr.mxu0 0.0
    %549 = vmatpush1.msra.mxu0 0.0
    %550 = vmatprep.subr.mxu0 0.0
    %551 = vmatpush1.msra.mxu0 0.0
    %552 = vmatprep.subr.mxu0 0.0
    %553 = vmatpush1.msra.mxu0 0.0
    %554 = vmatprep.subr.mxu0 0.0
    %555 = vmatpush1.msra.mxu0 0.0
    %556 = vmatprep.subr.mxu0 0.0
    %557 = vmatpush1.msra.mxu0 0.0
    %558 = vmatprep.subr.mxu0 0.0
    %559 = vmatpush1.msra.mxu0 0.0
    %560 = vmatprep.subr.mxu0 0.0
    %561 = vmatpush1.msra.mxu0 0.0
    %562 = vmatprep.subr.mxu0 0.0
    %563 = vmatpush1.msra.mxu0 0.0
    %564 = vmatprep.subr.mxu0 0.0
    %565 = vmatpush1.msra.mxu0 0.0
    %566 = vmatprep.subr.mxu0 0.0
    %567 = vmatpush1.msra.mxu0 0.0
    %568 = vmatprep.subr.mxu0 0.0
    %569 = vmatpush1.msra.mxu0 0.0
    %570 = vmatprep.subr.mxu0 0.0
    %571 = vmatpush1.msra.mxu0 0.0
    %572 = vmatprep.subr.mxu0 0.0
    %573 = vmatpush1.msra.mxu0 0.0
    %574 = vmatprep.subr.mxu0 0.0
    %575 = vmatpush1.msra.mxu0 0.0
    %576 = vmatprep.mubr.f32.mxu0 0.0
    %577 = vmatmul.mubr.f32.gmra.mrb[0].mxu0 %v510
    %v578 = vpop.f32.mrb[0].mxu0
    %v579 = vadd.f32 0.0, %v578
    %v580 = vpop.f32.mrb[0].mxu0
    %581 = vdwg.mxu0
    %v583 = vsel %vm179, %v338, 0
    %585 = vmatprep.subr.mxu0 0.0
    %586 = vmatpush1.msra.mxu0 %v161
    %587 = vmatprep.subr.mxu0 0.0
    %588 = vmatpush1.msra.mxu0 %v162
    %589 = vmatprep.subr.mxu0 0.0
    %590 = vmatpush1.msra.mxu0 0.0
    %591 = vmatprep.subr.mxu0 0.0
    %592 = vmatpush1.msra.mxu0 0.0
    %593 = vmatprep.subr.mxu0 0.0
    %594 = vmatpush1.msra.mxu0 0.0
    %595 = vmatprep.subr.mxu0 0.0
    %596 = vmatpush1.msra.mxu0 0.0
    %597 = vmatprep.subr.mxu0 0.0
    %598 = vmatpush1.msra.mxu0 0.0
    %599 = vmatprep.subr.mxu0 0.0
    %600 = vmatpush1.msra.mxu0 0.0
    %601 = vmatprep.subr.mxu0 0.0
    %602 = vmatpush1.msra.mxu0 0.0
    %603 = vmatprep.subr.mxu0 0.0
    %604 = vmatpush1.msra.mxu0 0.0
    %605 = vmatprep.subr.mxu0 0.0
    %606 = vmatpush1.msra.mxu0 0.0
    %607 = vmatprep.subr.mxu0 0.0
    %608 = vmatpush1.msra.mxu0 0.0
    %609 = vmatprep.subr.mxu0 0.0
    %610 = vmatpush1.msra.mxu0 0.0
    %611 = vmatprep.subr.mxu0 0.0
    %612 = vmatpush1.msra.mxu0 0.0
    %613 = vmatprep.subr.mxu0 0.0
    %614 = vmatpush1.msra.mxu0 0.0
    %615 = vmatprep.subr.mxu0 0.0
    %616 = vmatpush1.msra.mxu0 0.0
    %617 = vmatprep.subr.mxu0 0.0
    %618 = vmatpush1.msra.mxu0 0.0
    %619 = vmatprep.subr.mxu0 0.0
    %620 = vmatpush1.msra.mxu0 0.0
    %621 = vmatprep.subr.mxu0 0.0
    %622 = vmatpush1.msra.mxu0 0.0
    %623 = vmatprep.subr.mxu0 0.0
    %624 = vmatpush1.msra.mxu0 0.0
    %625 = vmatprep.subr.mxu0 0.0
    %626 = vmatpush1.msra.mxu0 0.0
    %627 = vmatprep.subr.mxu0 0.0
    %628 = vmatpush1.msra.mxu0 0.0
    %629 = vmatprep.subr.mxu0 0.0
    %630 = vmatpush1.msra.mxu0 0.0
    %631 = vmatprep.subr.mxu0 0.0
    %632 = vmatpush1.msra.mxu0 0.0
    %633 = vmatprep.subr.mxu0 0.0
    %634 = vmatpush1.msra.mxu0 0.0
    %635 = vmatprep.subr.mxu0 0.0
    %636 = vmatpush1.msra.mxu0 0.0
    %637 = vmatprep.subr.mxu0 0.0
    %638 = vmatpush1.msra.mxu0 0.0
    %639 = vmatprep.subr.mxu0 0.0
    %640 = vmatpush1.msra.mxu0 0.0
    %641 = vmatprep.subr.mxu0 0.0
    %642 = vmatpush1.msra.mxu0 0.0
    %643 = vmatprep.subr.mxu0 0.0
    %644 = vmatpush1.msra.mxu0 0.0
    %645 = vmatprep.subr.mxu0 0.0
    %646 = vmatpush1.msra.mxu0 0.0
    %647 = vmatprep.subr.mxu0 0.0
    %648 = vmatpush1.msra.mxu0 0.0
    %649 = vmatprep.mubr.f32.mxu0 0.0
    %650 = vmatmul.mubr.f32.gmra.mrb[0].mxu0 %v583
    %v651 = vpop.f32.mrb[0].mxu0
    %v652 = vadd.f32 %v579, %v651
    %v653 = vpop.f32.mrb[0].mxu0
    %654 = vdwg.mxu0
    %655 = vrot.lane.b32.xlu0 %v151, 96
    %v656 = vpop.permute.xlu0 %655
    %657 = vrot.lane.b32.xlu0 %v151, 32
    %v658 = vpop.permute.xlu0 %657
    %v659 = vsel %vm179, %v656, 0
    %v661 = vsel %vm179, %v658, 0
    %663 = vmatprep.subr.mxu0 0.0
    %664 = vmatpush1.xpose.msra.mxu0 %v661
    %665 = vmatprep.subr.mxu0 0.0
    %666 = vmatpush1.xpose.msra.mxu0 0.0
    %667 = vmatprep.subr.mxu0 0.0
    %668 = vmatpush1.xpose.msra.mxu0 0.0
    %669 = vmatprep.subr.mxu0 0.0
    %670 = vmatpush1.xpose.msra.mxu0 0.0
    %671 = vmatprep.subr.mxu0 0.0
    %672 = vmatpush1.xpose.msra.mxu0 0.0
    %673 = vmatprep.subr.mxu0 0.0
    %674 = vmatpush1.xpose.msra.mxu0 0.0
    %675 = vmatprep.subr.mxu0 0.0
    %676 = vmatpush1.xpose.msra.mxu0 0.0
    %677 = vmatprep.subr.mxu0 0.0
    %678 = vmatpush1.xpose.msra.mxu0 0.0
    %679 = vmatprep.subr.mxu0 0.0
    %680 = vmatpush1.xpose.msra.mxu0 0.0
    %681 = vmatprep.subr.mxu0 0.0
    %682 = vmatpush1.xpose.msra.mxu0 0.0
    %683 = vmatprep.subr.mxu0 0.0
    %684 = vmatpush1.xpose.msra.mxu0 0.0
    %685 = vmatprep.subr.mxu0 0.0
    %686 = vmatpush1.xpose.msra.mxu0 0.0
    %687 = vmatprep.subr.mxu0 0.0
    %688 = vmatpush1.xpose.msra.mxu0 0.0
    %689 = vmatprep.subr.mxu0 0.0
    %690 = vmatpush1.xpose.msra.mxu0 0.0
    %691 = vmatprep.subr.mxu0 0.0
    %692 = vmatpush1.xpose.msra.mxu0 0.0
    %693 = vmatprep.subr.mxu0 0.0
    %694 = vmatpush1.xpose.msra.mxu0 0.0
    %695 = vmatprep.subr.mxu0 0.0
    %696 = vmatpush1.xpose.msra.mxu0 0.0
    %697 = vmatprep.subr.mxu0 0.0
    %698 = vmatpush1.xpose.msra.mxu0 0.0
    %699 = vmatprep.subr.mxu0 0.0
    %700 = vmatpush1.xpose.msra.mxu0 0.0
    %701 = vmatprep.subr.mxu0 0.0
    %702 = vmatpush1.xpose.msra.mxu0 0.0
    %703 = vmatprep.subr.mxu0 0.0
    %704 = vmatpush1.xpose.msra.mxu0 0.0
    %705 = vmatprep.subr.mxu0 0.0
    %706 = vmatpush1.xpose.msra.mxu0 0.0
    %707 = vmatprep.subr.mxu0 0.0
    %708 = vmatpush1.xpose.msra.mxu0 0.0
    %709 = vmatprep.subr.mxu0 0.0
    %710 = vmatpush1.xpose.msra.mxu0 0.0
    %711 = vmatprep.subr.mxu0 0.0
    %712 = vmatpush1.xpose.msra.mxu0 0.0
    %713 = vmatprep.subr.mxu0 0.0
    %714 = vmatpush1.xpose.msra.mxu0 0.0
    %715 = vmatprep.subr.mxu0 0.0
    %716 = vmatpush1.xpose.msra.mxu0 0.0
    %717 = vmatprep.subr.mxu0 0.0
    %718 = vmatpush1.xpose.msra.mxu0 0.0
    %719 = vmatprep.subr.mxu0 0.0
    %720 = vmatpush1.xpose.msra.mxu0 0.0
    %721 = vmatprep.subr.mxu0 0.0
    %722 = vmatpush1.xpose.msra.mxu0 0.0
    %723 = vmatprep.subr.mxu0 0.0
    %724 = vmatpush1.xpose.msra.mxu0 0.0
    %725 = vmatprep.subr.mxu0 0.0
    %726 = vmatpush1.xpose.msra.mxu0 0.0
    %727 = vmatprep.mubr.f32.mxu0 0.0
    %728 = vmatmul.mubr.f32.gmra.mrb[0].mxu0 %v659
    %v729 = vpop.f32.mrb[0].mxu0
    %v730 = vadd.f32 0.0, %v729
    %v731 = vpop.f32.mrb[0].mxu0
    %732 = vdwg.mxu0
    %v733 = vmul.f32 %v730, 0.125
    %v734 = vadd.f32 %v733, %v175
    %v735 = vsel %vm256, %v734, -inf
    %736 = vmax.xlane.f32.xlu0 %v735
    %v737 = vpop.xlane.xlu0 %736
    %v738 = vsub.f32 %v734, %v737
    %v739 = vmul.f32 %v738, 1.442695
    %v740 = vpow.pop %v739
    %v741 = vsel %vm256, %v740, 0.0
    %742 = vadd.xlane.f32.xlu0 %v741
    %v743 = vpop.xlane.xlu0 %742
    %v744 = vrcp.pop %v743
    %v745 = vmul.f32 %v740, %v744
    %746 = vrot.lane.b32.xlu0 %v153, 96
    %v747 = vpop.permute.xlu0 %746
    %v750 = vsel %vm256, %v745, 0
    %752 = vmatprep.subr.mxu0 0.0
    %753 = vmatpush1.msra.mxu0 %v747
    %754 = vmatprep.subr.mxu0 0.0
    %755 = vmatpush1.msra.mxu0 0.0
    %756 = vmatprep.subr.mxu0 0.0
    %757 = vmatpush1.msra.mxu0 0.0
    %758 = vmatprep.subr.mxu0 0.0
    %759 = vmatpush1.msra.mxu0 0.0
    %760 = vmatprep.subr.mxu0 0.0
    %761 = vmatpush1.msra.mxu0 0.0
    %762 = vmatprep.subr.mxu0 0.0
    %763 = vmatpush1.msra.mxu0 0.0
    %764 = vmatprep.subr.mxu0 0.0
    %765 = vmatpush1.msra.mxu0 0.0
    %766 = vmatprep.subr.mxu0 0.0
    %767 = vmatpush1.msra.mxu0 0.0
    %768 = vmatprep.subr.mxu0 0.0
    %769 = vmatpush1.msra.mxu0 0.0
    %770 = vmatprep.subr.mxu0 0.0
    %771 = vmatpush1.msra.mxu0 0.0
    %772 = vmatprep.subr.mxu0 0.0
    %773 = vmatpush1.msra.mxu0 0.0
    %774 = vmatprep.subr.mxu0 0.0
    %775 = vmatpush1.msra.mxu0 0.0
    %776 = vmatprep.subr.mxu0 0.0
    %777 = vmatpush1.msra.mxu0 0.0
    %778 = vmatprep.subr.mxu0 0.0
    %779 = vmatpush1.msra.mxu0 0.0
    %780 = vmatprep.subr.mxu0 0.0
    %781 = vmatpush1.msra.mxu0 0.0
    %782 = vmatprep.subr.mxu0 0.0
    %783 = vmatpush1.msra.mxu0 0.0
    %784 = vmatprep.subr.mxu0 0.0
    %785 = vmatpush1.msra.mxu0 0.0
    %786 = vmatprep.subr.mxu0 0.0
    %787 = vmatpush1.msra.mxu0 0.0
    %788 = vmatprep.subr.mxu0 0.0
    %789 = vmatpush1.msra.mxu0 0.0
    %790 = vmatprep.subr.mxu0 0.0
    %791 = vmatpush1.msra.mxu0 0.0
    %792 = vmatprep.subr.mxu0 0.0
    %793 = vmatpush1.msra.mxu0 0.0
    %794 = vmatprep.subr.mxu0 0.0
    %795 = vmatpush1.msra.mxu0 0.0
    %796 = vmatprep.subr.mxu0 0.0
    %797 = vmatpush1.msra.mxu0 0.0
    %798 = vmatprep.subr.mxu0 0.0
    %799 = vmatpush1.msra.mxu0 0.0
    %800 = vmatprep.subr.mxu0 0.0
    %801 = vmatpush1.msra.mxu0 0.0
    %802 = vmatprep.subr.mxu0 0.0
    %803 = vmatpush1.msra.mxu0 0.0
    %804 = vmatprep.subr.mxu0 0.0
    %805 = vmatpush1.msra.mxu0 0.0
    %806 = vmatprep.subr.mxu0 0.0
    %807 = vmatpush1.msra.mxu0 0.0
    %808 = vmatprep.subr.mxu0 0.0
    %809 = vmatpush1.msra.mxu0 0.0
    %810 = vmatprep.subr.mxu0 0.0
    %811 = vmatpush1.msra.mxu0 0.0
    %812 = vmatprep.subr.mxu0 0.0
    %813 = vmatpush1.msra.mxu0 0.0
    %814 = vmatprep.subr.mxu0 0.0
    %815 = vmatpush1.msra.mxu0 0.0
    %816 = vmatprep.mubr.f32.mxu0 0.0
    %817 = vmatmul.mubr.f32.gmra.mrb[0].mxu0 %v750
    %v818 = vpop.f32.mrb[0].mxu0
    %v819 = vadd.f32 0.0, %v818
    %v820 = vpop.f32.mrb[0].mxu0
    %821 = vdwg.mxu0
    %v823 = vsel %vm179, %v819, 0
    %825 = vmatprep.subr.mxu0 0.0
    %826 = vmatpush1.msra.mxu0 %v165
    %827 = vmatprep.subr.mxu0 0.0
    %828 = vmatpush1.msra.mxu0 %v166
    %829 = vmatprep.subr.mxu0 0.0
    %830 = vmatpush1.msra.mxu0 0.0
    %831 = vmatprep.subr.mxu0 0.0
    %832 = vmatpush1.msra.mxu0 0.0
    %833 = vmatprep.subr.mxu0 0.0
    %834 = vmatpush1.msra.mxu0 0.0
    %835 = vmatprep.subr.mxu0 0.0
    %836 = vmatpush1.msra.mxu0 0.0
    %837 = vmatprep.subr.mxu0 0.0
    %838 = vmatpush1.msra.mxu0 0.0
    %839 = vmatprep.subr.mxu0 0.0
    %840 = vmatpush1.msra.mxu0 0.0
    %841 = vmatprep.subr.mxu0 0.0
    %842 = vmatpush1.msra.mxu0 0.0
    %843 = vmatprep.subr.mxu0 0.0
    %844 = vmatpush1.msra.mxu0 0.0
    %845 = vmatprep.subr.mxu0 0.0
    %846 = vmatpush1.msra.mxu0 0.0
    %847 = vmatprep.subr.mxu0 0.0
    %848 = vmatpush1.msra.mxu0 0.0
    %849 = vmatprep.subr.mxu0 0.0
    %850 = vmatpush1.msra.mxu0 0.0
    %851 = vmatprep.subr.mxu0 0.0
    %852 = vmatpush1.msra.mxu0 0.0
    %853 = vmatprep.subr.mxu0 0.0
    %854 = vmatpush1.msra.mxu0 0.0
    %855 = vmatprep.subr.mxu0 0.0
    %856 = vmatpush1.msra.mxu0 0.0
    %857 = vmatprep.subr.mxu0 0.0
    %858 = vmatpush1.msra.mxu0 0.0
    %859 = vmatprep.subr.mxu0 0.0
    %860 = vmatpush1.msra.mxu0 0.0
    %861 = vmatprep.subr.mxu0 0.0
    %862 = vmatpush1.msra.mxu0 0.0
    %863 = vmatprep.subr.mxu0 0.0
    %864 = vmatpush1.msra.mxu0 0.0
    %865 = vmatprep.subr.mxu0 0.0
    %866 = vmatpush1.msra.mxu0 0.0
    %867 = vmatprep.subr.mxu0 0.0
    %868 = vmatpush1.msra.mxu0 0.0
    %869 = vmatprep.subr.mxu0 0.0
    %870 = vmatpush1.msra.mxu0 0.0
    %871 = vmatprep.subr.mxu0 0.0
    %872 = vmatpush1.msra.mxu0 0.0
    %873 = vmatprep.subr.mxu0 0.0
    %874 = vmatpush1.msra.mxu0 0.0
    %875 = vmatprep.subr.mxu0 0.0
    %876 = vmatpush1.msra.mxu0 0.0
    %877 = vmatprep.subr.mxu0 0.0
    %878 = vmatpush1.msra.mxu0 0.0
    %879 = vmatprep.subr.mxu0 0.0
    %880 = vmatpush1.msra.mxu0 0.0
    %881 = vmatprep.subr.mxu0 0.0
    %882 = vmatpush1.msra.mxu0 0.0
    %883 = vmatprep.subr.mxu0 0.0
    %884 = vmatpush1.msra.mxu0 0.0
    %885 = vmatprep.subr.mxu0 0.0
    %886 = vmatpush1.msra.mxu0 0.0
    %887 = vmatprep.subr.mxu0 0.0
    %888 = vmatpush1.msra.mxu0 0.0
    %889 = vmatprep.mubr.f32.mxu0 0.0
    %890 = vmatmul.mubr.f32.gmra.mrb[0].mxu0 %v823
    %v891 = vpop.f32.mrb[0].mxu0
    %v892 = vadd.f32 0.0, %v891
    %v893 = vpop.f32.mrb[0].mxu0
    %894 = vdwg.mxu0
    %v895 = vadd.f32 %v652, %v892
    %896 = vrot.lane.b32.xlu0 %v151, 80
    %v897 = vpop.permute.xlu0 %896
    %898 = vrot.lane.b32.xlu0 %v151, 16
    %v899 = vpop.permute.xlu0 %898
    %v900 = vsel %vm179, %v897, 0
    %v902 = vsel %vm179, %v899, 0
    %904 = vmatprep.subr.mxu0 0.0
    %905 = vmatpush1.xpose.msra.mxu0 %v902
    %906 = vmatprep.subr.mxu0 0.0
    %907 = vmatpush1.xpose.msra.mxu0 0.0
    %908 = vmatprep.subr.mxu0 0.0
    %909 = vmatpush1.xpose.msra.mxu0 0.0
    %910 = vmatprep.subr.mxu0 0.0
    %911 = vmatpush1.xpose.msra.mxu0 0.0
    %912 = vmatprep.subr.mxu0 0.0
    %913 = vmatpush1.xpose.msra.mxu0 0.0
    %914 = vmatprep.subr.mxu0 0.0
    %915 = vmatpush1.xpose.msra.mxu0 0.0
    %916 = vmatprep.subr.mxu0 0.0
    %917 = vmatpush1.xpose.msra.mxu0 0.0
    %918 = vmatprep.subr.mxu0 0.0
    %919 = vmatpush1.xpose.msra.mxu0 0.0
    %920 = vmatprep.subr.mxu0 0.0
    %921 = vmatpush1.xpose.msra.mxu0 0.0
    %922 = vmatprep.subr.mxu0 0.0
    %923 = vmatpush1.xpose.msra.mxu0 0.0
    %924 = vmatprep.subr.mxu0 0.0
    %925 = vmatpush1.xpose.msra.mxu0 0.0
    %926 = vmatprep.subr.mxu0 0.0
    %927 = vmatpush1.xpose.msra.mxu0 0.0
    %928 = vmatprep.subr.mxu0 0.0
    %929 = vmatpush1.xpose.msra.mxu0 0.0
    %930 = vmatprep.subr.mxu0 0.0
    %931 = vmatpush1.xpose.msra.mxu0 0.0
    %932 = vmatprep.subr.mxu0 0.0
    %933 = vmatpush1.xpose.msra.mxu0 0.0
    %934 = vmatprep.subr.mxu0 0.0
    %935 = vmatpush1.xpose.msra.mxu0 0.0
    %936 = vmatprep.subr.mxu0 0.0
    %937 = vmatpush1.xpose.msra.mxu0 0.0
    %938 = vmatprep.subr.mxu0 0.0
    %939 = vmatpush1.xpose.msra.mxu0 0.0
    %940 = vmatprep.subr.mxu0 0.0
    %941 = vmatpush1.xpose.msra.mxu0 0.0
    %942 = vmatprep.subr.mxu0 0.0
    %943 = vmatpush1.xpose.msra.mxu0 0.0
    %944 = vmatprep.subr.mxu0 0.0
    %945 = vmatpush1.xpose.msra.mxu0 0.0
    %946 = vmatprep.subr.mxu0 0.0
    %947 = vmatpush1.xpose.msra.mxu0 0.0
    %948 = vmatprep.subr.mxu0 0.0
    %949 = vmatpush1.xpose.msra.mxu0 0.0
    %950 = vmatprep.subr.mxu0 0.0
    %951 = vmatpush1.xpose.msra.mxu0 0.0
    %952 = vmatprep.subr.mxu0 0.0
    %953 = vmatpush1.xpose.msra.mxu0 0.0
    %954 = vmatprep.subr.mxu0 0.0
    %955 = vmatpush1.xpose.msra.mxu0 0.0
    %956 = vmatprep.subr.mxu0 0.0
    %957 = vmatpush1.xpose.msra.mxu0 0.0
    %958 = vmatprep.subr.mxu0 0.0
    %959 = vmatpush1.xpose.msra.mxu0 0.0
    %960 = vmatprep.subr.mxu0 0.0
    %961 = vmatpush1.xpose.msra.mxu0 0.0
    %962 = vmatprep.subr.mxu0 0.0
    %963 = vmatpush1.xpose.msra.mxu0 0.0
    %964 = vmatprep.subr.mxu0 0.0
    %965 = vmatpush1.xpose.msra.mxu0 0.0
    %966 = vmatprep.subr.mxu0 0.0
    %967 = vmatpush1.xpose.msra.mxu0 0.0
    %968 = vmatprep.mubr.f32.mxu0 0.0
    %969 = vmatmul.mubr.f32.gmra.mrb[0].mxu0 %v900
    %v970 = vpop.f32.mrb[0].mxu0
    %v971 = vadd.f32 0.0, %v970
    %v972 = vpop.f32.mrb[0].mxu0
    %973 = vdwg.mxu0
    %v974 = vmul.f32 %v971, 0.125
    %v975 = vadd.f32 %v974, %v175
    %v976 = vsel %vm256, %v975, -inf
    %977 = vmax.xlane.f32.xlu0 %v976
    %v978 = vpop.xlane.xlu0 %977
    %v979 = vsub.f32 %v975, %v978
    %v980 = vmul.f32 %v979, 1.442695
    %v981 = vpow.pop %v980
    %v982 = vsel %vm256, %v981, 0.0
    %983 = vadd.xlane.f32.xlu0 %v982
    %v984 = vpop.xlane.xlu0 %983
    %v985 = vrcp.pop %v984
    %v986 = vmul.f32 %v981, %v985
    %987 = vrot.lane.b32.xlu0 %v153, 80
    %v988 = vpop.permute.xlu0 %987
    %v991 = vsel %vm256, %v986, 0
    %993 = vmatprep.subr.mxu0 0.0
    %994 = vmatpush1.msra.mxu0 %v988
    %995 = vmatprep.subr.mxu0 0.0
    %996 = vmatpush1.msra.mxu0 0.0
    %997 = vmatprep.subr.mxu0 0.0
    %998 = vmatpush1.msra.mxu0 0.0
    %999 = vmatprep.subr.mxu0 0.0
    %1000 = vmatpush1.msra.mxu0 0.0
    %1001 = vmatprep.subr.mxu0 0.0
    %1002 = vmatpush1.msra.mxu0 0.0
    %1003 = vmatprep.subr.mxu0 0.0
    %1004 = vmatpush1.msra.mxu0 0.0
    %1005 = vmatprep.subr.mxu0 0.0
    %1006 = vmatpush1.msra.mxu0 0.0
    %1007 = vmatprep.subr.mxu0 0.0
    %1008 = vmatpush1.msra.mxu0 0.0
    %1009 = vmatprep.subr.mxu0 0.0
    %1010 = vmatpush1.msra.mxu0 0.0
    %1011 = vmatprep.subr.mxu0 0.0
    %1012 = vmatpush1.msra.mxu0 0.0
    %1013 = vmatprep.subr.mxu0 0.0
    %1014 = vmatpush1.msra.mxu0 0.0
    %1015 = vmatprep.subr.mxu0 0.0
    %1016 = vmatpush1.msra.mxu0 0.0
    %1017 = vmatprep.subr.mxu0 0.0
    %1018 = vmatpush1.msra.mxu0 0.0
    %1019 = vmatprep.subr.mxu0 0.0
    %1020 = vmatpush1.msra.mxu0 0.0
    %1021 = vmatprep.subr.mxu0 0.0
    %1022 = vmatpush1.msra.mxu0 0.0
    %1023 = vmatprep.subr.mxu0 0.0
    %1024 = vmatpush1.msra.mxu0 0.0
    %1025 = vmatprep.subr.mxu0 0.0
    %1026 = vmatpush1.msra.mxu0 0.0
    %1027 = vmatprep.subr.mxu0 0.0
    %1028 = vmatpush1.msra.mxu0 0.0
    %1029 = vmatprep.subr.mxu0 0.0
    %1030 = vmatpush1.msra.mxu0 0.0
    %1031 = vmatprep.subr.mxu0 0.0
    %1032 = vmatpush1.msra.mxu0 0.0
    %1033 = vmatprep.subr.mxu0 0.0
    %1034 = vmatpush1.msra.mxu0 0.0
    %1035 = vmatprep.subr.mxu0 0.0
    %1036 = vmatpush1.msra.mxu0 0.0
    %1037 = vmatprep.subr.mxu0 0.0
    %1038 = vmatpush1.msra.mxu0 0.0
    %1039 = vmatprep.subr.mxu0 0.0
    %1040 = vmatpush1.msra.mxu0 0.0
    %1041 = vmatprep.subr.mxu0 0.0
    %1042 = vmatpush1.msra.mxu0 0.0
    %1043 = vmatprep.subr.mxu0 0.0
    %1044 = vmatpush1.msra.mxu0 0.0
    %1045 = vmatprep.subr.mxu0 0.0
    %1046 = vmatpush1.msra.mxu0 0.0
    %1047 = vmatprep.subr.mxu0 0.0
    %1048 = vmatpush1.msra.mxu0 0.0
    %1049 = vmatprep.subr.mxu0 0.0
    %1050 = vmatpush1.msra.mxu0 0.0
    %1051 = vmatprep.subr.mxu0 0.0
    %1052 = vmatpush1.msra.mxu0 0.0
    %1053 = vmatprep.subr.mxu0 0.0
    %1054 = vmatpush1.msra.mxu0 0.0
    %1055 = vmatprep.subr.mxu0 0.0
    %1056 = vmatpush1.msra.mxu0 0.0
    %1057 = vmatprep.mubr.f32.mxu0 0.0
    %1058 = vmatmul.mubr.f32.gmra.mrb[0].mxu0 %v991
    %v1059 = vpop.f32.mrb[0].mxu0
    %v1060 = vadd.f32 0.0, %v1059
    %v1061 = vpop.f32.mrb[0].mxu0
    %1062 = vdwg.mxu0
    %v1064 = vsel %vm179, %v1060, 0
    %1066 = vmatprep.subr.mxu0 0.0
    %1067 = vmatpush1.msra.mxu0 %v167
    %1068 = vmatprep.subr.mxu0 0.0
    %1069 = vmatpush1.msra.mxu0 %v168
    %1070 = vmatprep.subr.mxu0 0.0
    %1071 = vmatpush1.msra.mxu0 0.0
    %1072 = vmatprep.subr.mxu0 0.0
    %1073 = vmatpush1.msra.mxu0 0.0
    %1074 = vmatprep.subr.mxu0 0.0
    %1075 = vmatpush1.msra.mxu0 0.0
    %1076 = vmatprep.subr.mxu0 0.0
    %1077 = vmatpush1.msra.mxu0 0.0
    %1078 = vmatprep.subr.mxu0 0.0
    %1079 = vmatpush1.msra.mxu0 0.0
    %1080 = vmatprep.subr.mxu0 0.0
    %1081 = vmatpush1.msra.mxu0 0.0
    %1082 = vmatprep.subr.mxu0 0.0
    %1083 = vmatpush1.msra.mxu0 0.0
    %1084 = vmatprep.subr.mxu0 0.0
    %1085 = vmatpush1.msra.mxu0 0.0
    %1086 = vmatprep.subr.mxu0 0.0
    %1087 = vmatpush1.msra.mxu0 0.0
    %1088 = vmatprep.subr.mxu0 0.0
    %1089 = vmatpush1.msra.mxu0 0.0
    %1090 = vmatprep.subr.mxu0 0.0
    %1091 = vmatpush1.msra.mxu0 0.0
    %1092 = vmatprep.subr.mxu0 0.0
    %1093 = vmatpush1.msra.mxu0 0.0
    %1094 = vmatprep.subr.mxu0 0.0
    %1095 = vmatpush1.msra.mxu0 0.0
    %1096 = vmatprep.subr.mxu0 0.0
    %1097 = vmatpush1.msra.mxu0 0.0
    %1098 = vmatprep.subr.mxu0 0.0
    %1099 = vmatpush1.msra.mxu0 0.0
    %1100 = vmatprep.subr.mxu0 0.0
    %1101 = vmatpush1.msra.mxu0 0.0
    %1102 = vmatprep.subr.mxu0 0.0
    %1103 = vmatpush1.msra.mxu0 0.0
    %1104 = vmatprep.subr.mxu0 0.0
    %1105 = vmatpush1.msra.mxu0 0.0
    %1106 = vmatprep.subr.mxu0 0.0
    %1107 = vmatpush1.msra.mxu0 0.0
    %1108 = vmatprep.subr.mxu0 0.0
    %1109 = vmatpush1.msra.mxu0 0.0
    %1110 = vmatprep.subr.mxu0 0.0
    %1111 = vmatpush1.msra.mxu0 0.0
    %1112 = vmatprep.subr.mxu0 0.0
    %1113 = vmatpush1.msra.mxu0 0.0
    %1114 = vmatprep.subr.mxu0 0.0
    %1115 = vmatpush1.msra.mxu0 0.0
    %1116 = vmatprep.subr.mxu0 0.0
    %1117 = vmatpush1.msra.mxu0 0.0
    %1118 = vmatprep.subr.mxu0 0.0
    %1119 = vmatpush1.msra.mxu0 0.0
    %1120 = vmatprep.subr.mxu0 0.0
    %1121 = vmatpush1.msra.mxu0 0.0
    %1122 = vmatprep.subr.mxu0 0.0
    %1123 = vmatpush1.msra.mxu0 0.0
    %1124 = vmatprep.subr.mxu0 0.0
    %1125 = vmatpush1.msra.mxu0 0.0
    %1126 = vmatprep.subr.mxu0 0.0
    %1127 = vmatpush1.msra.mxu0 0.0
    %1128 = vmatprep.subr.mxu0 0.0
    %1129 = vmatpush1.msra.mxu0 0.0
    %1130 = vmatprep.mubr.f32.mxu0 0.0
    %1131 = vmatmul.mubr.f32.gmra.mrb[0].mxu0 %v1064
    %v1132 = vpop.f32.mrb[0].mxu0
    %v1133 = vadd.f32 0.0, %v1132
    %v1134 = vpop.f32.mrb[0].mxu0
    %1135 = vdwg.mxu0
    %v1136 = vadd.f32 %v895, %v1133
    %v1138 = vlaneseq
    %v1139 = vshrl.u32 %v1138, 7
    %v1140 = vsub.s32 0, %v1139
    %v1141 = vrot.slane %v169, %v1140
    %v1143 = vadd.f32 %v1136, %v1141
    %1144 = vst [vmem:[#allocation8] sm:$0xff] %v1143
    %1146 = vrot.lane.b32.xlu0 %v157, 64
    %v1147 = vpop.permute.xlu0 %1146
    %v1148 = vsel %vm179, %v157, 0
    %v1150 = vsel %vm179, %v1147, 0
    %1152 = vmatprep.subr.mxu0 0.0
    %1153 = vmatpush1.xpose.msra.mxu0 %v1150
    %1154 = vmatprep.subr.mxu0 0.0
    %1155 = vmatpush1.xpose.msra.mxu0 0.0
    %1156 = vmatprep.subr.mxu0 0.0
    %1157 = vmatpush1.xpose.msra.mxu0 0.0
    %1158 = vmatprep.subr.mxu0 0.0
    %1159 = vmatpush1.xpose.msra.mxu0 0.0
    %1160 = vmatprep.subr.mxu0 0.0
    %1161 = vmatpush1.xpose.msra.mxu0 0.0
    %1162 = vmatprep.subr.mxu0 0.0
    %1163 = vmatpush1.xpose.msra.mxu0 0.0
    %1164 = vmatprep.subr.mxu0 0.0
    %1165 = vmatpush1.xpose.msra.mxu0 0.0
    %1166 = vmatprep.subr.mxu0 0.0
    %1167 = vmatpush1.xpose.msra.mxu0 0.0
    %1168 = vmatprep.subr.mxu0 0.0
    %1169 = vmatpush1.xpose.msra.mxu0 0.0
    %1170 = vmatprep.subr.mxu0 0.0
    %1171 = vmatpush1.xpose.msra.mxu0 0.0
    %1172 = vmatprep.subr.mxu0 0.0
    %1173 = vmatpush1.xpose.msra.mxu0 0.0
    %1174 = vmatprep.subr.mxu0 0.0
    %1175 = vmatpush1.xpose.msra.mxu0 0.0
    %1176 = vmatprep.subr.mxu0 0.0
    %1177 = vmatpush1.xpose.msra.mxu0 0.0
    %1178 = vmatprep.subr.mxu0 0.0
    %1179 = vmatpush1.xpose.msra.mxu0 0.0
    %1180 = vmatprep.subr.mxu0 0.0
    %1181 = vmatpush1.xpose.msra.mxu0 0.0
    %1182 = vmatprep.subr.mxu0 0.0
    %1183 = vmatpush1.xpose.msra.mxu0 0.0
    %1184 = vmatprep.subr.mxu0 0.0
    %1185 = vmatpush1.xpose.msra.mxu0 0.0
    %1186 = vmatprep.subr.mxu0 0.0
    %1187 = vmatpush1.xpose.msra.mxu0 0.0
    %1188 = vmatprep.subr.mxu0 0.0
    %1189 = vmatpush1.xpose.msra.mxu0 0.0
    %1190 = vmatprep.subr.mxu0 0.0
    %1191 = vmatpush1.xpose.msra.mxu0 0.0
    %1192 = vmatprep.subr.mxu0 0.0
    %1193 = vmatpush1.xpose.msra.mxu0 0.0
    %1194 = vmatprep.subr.mxu0 0.0
    %1195 = vmatpush1.xpose.msra.mxu0 0.0
    %1196 = vmatprep.subr.mxu0 0.0
    %1197 = vmatpush1.xpose.msra.mxu0 0.0
    %1198 = vmatprep.subr.mxu0 0.0
    %1199 = vmatpush1.xpose.msra.mxu0 0.0
    %1200 = vmatprep.subr.mxu0 0.0
    %1201 = vmatpush1.xpose.msra.mxu0 0.0
    %1202 = vmatprep.subr.mxu0 0.0
    %1203 = vmatpush1.xpose.msra.mxu0 0.0
    %1204 = vmatprep.subr.mxu0 0.0
    %1205 = vmatpush1.xpose.msra.mxu0 0.0
    %1206 = vmatprep.subr.mxu0 0.0
    %1207 = vmatpush1.xpose.msra.mxu0 0.0
    %1208 = vmatprep.subr.mxu0 0.0
    %1209 = vmatpush1.xpose.msra.mxu0 0.0
    %1210 = vmatprep.subr.mxu0 0.0
    %1211 = vmatpush1.xpose.msra.mxu0 0.0
    %1212 = vmatprep.subr.mxu0 0.0
    %1213 = vmatpush1.xpose.msra.mxu0 0.0
    %1214 = vmatprep.subr.mxu0 0.0
    %1215 = vmatpush1.xpose.msra.mxu0 0.0
    %1216 = vmatprep.mubr.f32.mxu0 0.0
    %1217 = vmatmul.mubr.f32.gmra.mrb[0].mxu0 %v1148
    %v1218 = vpop.f32.mrb[0].mxu0
    %v1219 = vadd.f32 0.0, %v1218
    %v1220 = vpop.f32.mrb[0].mxu0
    %1221 = vdwg.mxu0
    %v1222 = vmul.f32 %v1219, 0.125
    %v1223 = vadd.f32 %v1222, %v175
    %v1224 = vsel %vm256, %v1223, -inf
    %1225 = vmax.xlane.f32.xlu0 %v1224
    %v1226 = vpop.xlane.xlu0 %1225
    %v1227 = vsub.f32 %v1223, %v1226
    %v1228 = vmul.f32 %v1227, 1.442695
    %v1229 = vpow.pop %v1228
    %v1230 = vsel %vm256, %v1229, 0.0
    %1231 = vadd.xlane.f32.xlu0 %v1230
    %v1232 = vpop.xlane.xlu0 %1231
    %v1233 = vrcp.pop %v1232
    %v1234 = vmul.f32 %v1229, %v1233
    %v1236 = vsel %vm256, %v1234, 0
    %1238 = vmatprep.subr.mxu0 0.0
    %1239 = vmatpush1.msra.mxu0 %v159
    %1240 = vmatprep.subr.mxu0 0.0
    %1241 = vmatpush1.msra.mxu0 0.0
    %1242 = vmatprep.subr.mxu0 0.0
    %1243 = vmatpush1.msra.mxu0 0.0
    %1244 = vmatprep.subr.mxu0 0.0
    %1245 = vmatpush1.msra.mxu0 0.0
    %1246 = vmatprep.subr.mxu0 0.0
    %1247 = vmatpush1.msra.mxu0 0.0
    %1248 = vmatprep.subr.mxu0 0.0
    %1249 = vmatpush1.msra.mxu0 0.0
    %1250 = vmatprep.subr.mxu0 0.0
    %1251 = vmatpush1.msra.mxu0 0.0
    %1252 = vmatprep.subr.mxu0 0.0
    %1253 = vmatpush1.msra.mxu0 0.0
    %1254 = vmatprep.subr.mxu0 0.0
    %1255 = vmatpush1.msra.mxu0 0.0
    %1256 = vmatprep.subr.mxu0 0.0
    %1257 = vmatpush1.msra.mxu0 0.0
    %1258 = vmatprep.subr.mxu0 0.0
    %1259 = vmatpush1.msra.mxu0 0.0
    %1260 = vmatprep.subr.mxu0 0.0
    %1261 = vmatpush1.msra.mxu0 0.0
    %1262 = vmatprep.subr.mxu0 0.0
    %1263 = vmatpush1.msra.mxu0 0.0
    %1264 = vmatprep.subr.mxu0 0.0
    %1265 = vmatpush1.msra.mxu0 0.0
    %1266 = vmatprep.subr.mxu0 0.0
    %1267 = vmatpush1.msra.mxu0 0.0
    %1268 = vmatprep.subr.mxu0 0.0
    %1269 = vmatpush1.msra.mxu0 0.0
    %1270 = vmatprep.subr.mxu0 0.0
    %1271 = vmatpush1.msra.mxu0 0.0
    %1272 = vmatprep.subr.mxu0 0.0
    %1273 = vmatpush1.msra.mxu0 0.0
    %1274 = vmatprep.subr.mxu0 0.0
    %1275 = vmatpush1.msra.mxu0 0.0
    %1276 = vmatprep.subr.mxu0 0.0
    %1277 = vmatpush1.msra.mxu0 0.0
    %1278 = vmatprep.subr.mxu0 0.0
    %1279 = vmatpush1.msra.mxu0 0.0
    %1280 = vmatprep.subr.mxu0 0.0
    %1281 = vmatpush1.msra.mxu0 0.0
    %1282 = vmatprep.subr.mxu0 0.0
    %1283 = vmatpush1.msra.mxu0 0.0
    %1284 = vmatprep.subr.mxu0 0.0
    %1285 = vmatpush1.msra.mxu0 0.0
    %1286 = vmatprep.subr.mxu0 0.0
    %1287 = vmatpush1.msra.mxu0 0.0
    %1288 = vmatprep.subr.mxu0 0.0
    %1289 = vmatpush1.msra.mxu0 0.0
    %1290 = vmatprep.subr.mxu0 0.0
    %1291 = vmatpush1.msra.mxu0 0.0
    %1292 = vmatprep.subr.mxu0 0.0
    %1293 = vmatpush1.msra.mxu0 0.0
    %1294 = vmatprep.subr.mxu0 0.0
    %1295 = vmatpush1.msra.mxu0 0.0
    %1296 = vmatprep.subr.mxu0 0.0
    %1297 = vmatpush1.msra.mxu0 0.0
    %1298 = vmatprep.subr.mxu0 0.0
    %1299 = vmatpush1.msra.mxu0 0.0
    %1300 = vmatprep.subr.mxu0 0.0
    %1301 = vmatpush1.msra.mxu0 0.0
    %1302 = vmatprep.mubr.f32.mxu0 0.0
    %1303 = vmatmul.mubr.f32.gmra.mrb[0].mxu0 %v1236
    %v1304 = vpop.f32.mrb[0].mxu0
    %v1305 = vadd.f32 0.0, %v1304
    %v1306 = vpop.f32.mrb[0].mxu0
    %1307 = vdwg.mxu0
    %1308 = vrot.lane.b32.xlu0 %v157, 112
    %v1309 = vpop.permute.xlu0 %1308
    %1310 = vrot.lane.b32.xlu0 %v157, 48
    %v1311 = vpop.permute.xlu0 %1310
    %v1312 = vsel %vm179, %v1309, 0
    %v1314 = vsel %vm179, %v1311, 0
    %1316 = vmatprep.subr.mxu0 0.0
    %1317 = vmatpush1.xpose.msra.mxu0 %v1314
    %1318 = vmatprep.subr.mxu0 0.0
    %1319 = vmatpush1.xpose.msra.mxu0 0.0
    %1320 = vmatprep.subr.mxu0 0.0
    %1321 = vmatpush1.xpose.msra.mxu0 0.0
    %1322 = vmatprep.subr.mxu0 0.0
    %1323 = vmatpush1.xpose.msra.mxu0 0.0
    %1324 = vmatprep.subr.mxu0 0.0
    %1325 = vmatpush1.xpose.msra.mxu0 0.0
    %1326 = vmatprep.subr.mxu0 0.0
    %1327 = vmatpush1.xpose.msra.mxu0 0.0
    %1328 = vmatprep.subr.mxu0 0.0
    %1329 = vmatpush1.xpose.msra.mxu0 0.0
    %1330 = vmatprep.subr.mxu0 0.0
    %1331 = vmatpush1.xpose.msra.mxu0 0.0
    %1332 = vmatprep.subr.mxu0 0.0
    %1333 = vmatpush1.xpose.msra.mxu0 0.0
    %1334 = vmatprep.subr.mxu0 0.0
    %1335 = vmatpush1.xpose.msra.mxu0 0.0
    %1336 = vmatprep.subr.mxu0 0.0
    %1337 = vmatpush1.xpose.msra.mxu0 0.0
    %1338 = vmatprep.subr.mxu0 0.0
    %1339 = vmatpush1.xpose.msra.mxu0 0.0
    %1340 = vmatprep.subr.mxu0 0.0
    %1341 = vmatpush1.xpose.msra.mxu0 0.0
    %1342 = vmatprep.subr.mxu0 0.0
    %1343 = vmatpush1.xpose.msra.mxu0 0.0
    %1344 = vmatprep.subr.mxu0 0.0
    %1345 = vmatpush1.xpose.msra.mxu0 0.0
    %1346 = vmatprep.subr.mxu0 0.0
    %1347 = vmatpush1.xpose.msra.mxu0 0.0
    %1348 = vmatprep.subr.mxu0 0.0
    %1349 = vmatpush1.xpose.msra.mxu0 0.0
    %1350 = vmatprep.subr.mxu0 0.0
    %1351 = vmatpush1.xpose.msra.mxu0 0.0
    %1352 = vmatprep.subr.mxu0 0.0
    %1353 = vmatpush1.xpose.msra.mxu0 0.0
    %1354 = vmatprep.subr.mxu0 0.0
    %1355 = vmatpush1.xpose.msra.mxu0 0.0
    %1356 = vmatprep.subr.mxu0 0.0
    %1357 = vmatpush1.xpose.msra.mxu0 0.0
    %1358 = vmatprep.subr.mxu0 0.0
    %1359 = vmatpush1.xpose.msra.mxu0 0.0
    %1360 = vmatprep.subr.mxu0 0.0
    %1361 = vmatpush1.xpose.msra.mxu0 0.0
    %1362 = vmatprep.subr.mxu0 0.0
    %1363 = vmatpush1.xpose.msra.mxu0 0.0
    %1364 = vmatprep.subr.mxu0 0.0
    %1365 = vmatpush1.xpose.msra.mxu0 0.0
    %1366 = vmatprep.subr.mxu0 0.0
    %1367 = vmatpush1.xpose.msra.mxu0 0.0
    %1368 = vmatprep.subr.mxu0 0.0
    %1369 = vmatpush1.xpose.msra.mxu0 0.0
    %1370 = vmatprep.subr.mxu0 0.0
    %1371 = vmatpush1.xpose.msra.mxu0 0.0
    %1372 = vmatprep.subr.mxu0 0.0
    %1373 = vmatpush1.xpose.msra.mxu0 0.0
    %1374 = vmatprep.subr.mxu0 0.0
    %1375 = vmatpush1.xpose.msra.mxu0 0.0
    %1376 = vmatprep.subr.mxu0 0.0
    %1377 = vmatpush1.xpose.msra.mxu0 0.0
    %1378 = vmatprep.subr.mxu0 0.0
    %1379 = vmatpush1.xpose.msra.mxu0 0.0
    %1380 = vmatprep.mubr.f32.mxu0 0.0
    %1381 = vmatmul.mubr.f32.gmra.mrb[0].mxu0 %v1312
    %v1382 = vpop.f32.mrb[0].mxu0
    %v1383 = vadd.f32 0.0, %v1382
    %v1384 = vpop.f32.mrb[0].mxu0
    %1385 = vdwg.mxu0
    %v1386 = vmul.f32 %v1383, 0.125
    %v1387 = vadd.f32 %v1386, %v175
    %v1388 = vsel %vm256, %v1387, -inf
    %1389 = vmax.xlane.f32.xlu0 %v1388
    %v1390 = vpop.xlane.xlu0 %1389
    %v1391 = vsub.f32 %v1387, %v1390
    %v1392 = vmul.f32 %v1391, 1.442695
    %v1393 = vpow.pop %v1392
    %v1394 = vsel %vm256, %v1393, 0.0
    %1395 = vadd.xlane.f32.xlu0 %v1394
    %v1396 = vpop.xlane.xlu0 %1395
    %v1397 = vrcp.pop %v1396
    %v1398 = vmul.f32 %v1393, %v1397
    %1400 = vrot.lane.b32.xlu0 %v159, 112
    %v1401 = vpop.permute.xlu0 %1400
    %v1404 = vsel %vm256, %v1398, 0
    %1406 = vmatprep.subr.mxu0 0.0
    %1407 = vmatpush1.msra.mxu0 %v1401
    %1408 = vmatprep.subr.mxu0 0.0
    %1409 = vmatpush1.msra.mxu0 0.0
    %1410 = vmatprep.subr.mxu0 0.0
    %1411 = vmatpush1.msra.mxu0 0.0
    %1412 = vmatprep.subr.mxu0 0.0
    %1413 = vmatpush1.msra.mxu0 0.0
    %1414 = vmatprep.subr.mxu0 0.0
    %1415 = vmatpush1.msra.mxu0 0.0
    %1416 = vmatprep.subr.mxu0 0.0
    %1417 = vmatpush1.msra.mxu0 0.0
    %1418 = vmatprep.subr.mxu0 0.0
    %1419 = vmatpush1.msra.mxu0 0.0
    %1420 = vmatprep.subr.mxu0 0.0
    %1421 = vmatpush1.msra.mxu0 0.0
    %1422 = vmatprep.subr.mxu0 0.0
    %1423 = vmatpush1.msra.mxu0 0.0
    %1424 = vmatprep.subr.mxu0 0.0
    %1425 = vmatpush1.msra.mxu0 0.0
    %1426 = vmatprep.subr.mxu0 0.0
    %1427 = vmatpush1.msra.mxu0 0.0
    %1428 = vmatprep.subr.mxu0 0.0
    %1429 = vmatpush1.msra.mxu0 0.0
    %1430 = vmatprep.subr.mxu0 0.0
    %1431 = vmatpush1.msra.mxu0 0.0
    %1432 = vmatprep.subr.mxu0 0.0
    %1433 = vmatpush1.msra.mxu0 0.0
    %1434 = vmatprep.subr.mxu0 0.0
    %1435 = vmatpush1.msra.mxu0 0.0
    %1436 = vmatprep.subr.mxu0 0.0
    %1437 = vmatpush1.msra.mxu0 0.0
    %1438 = vmatprep.subr.mxu0 0.0
    %1439 = vmatpush1.msra.mxu0 0.0
    %1440 = vmatprep.subr.mxu0 0.0
    %1441 = vmatpush1.msra.mxu0 0.0
    %1442 = vmatprep.subr.mxu0 0.0
    %1443 = vmatpush1.msra.mxu0 0.0
    %1444 = vmatprep.subr.mxu0 0.0
    %1445 = vmatpush1.msra.mxu0 0.0
    %1446 = vmatprep.subr.mxu0 0.0
    %1447 = vmatpush1.msra.mxu0 0.0
    %1448 = vmatprep.subr.mxu0 0.0
    %1449 = vmatpush1.msra.mxu0 0.0
    %1450 = vmatprep.subr.mxu0 0.0
    %1451 = vmatpush1.msra.mxu0 0.0
    %1452 = vmatprep.subr.mxu0 0.0
    %1453 = vmatpush1.msra.mxu0 0.0
    %1454 = vmatprep.subr.mxu0 0.0
    %1455 = vmatpush1.msra.mxu0 0.0
    %1456 = vmatprep.subr.mxu0 0.0
    %1457 = vmatpush1.msra.mxu0 0.0
    %1458 = vmatprep.subr.mxu0 0.0
    %1459 = vmatpush1.msra.mxu0 0.0
    %1460 = vmatprep.subr.mxu0 0.0
    %1461 = vmatpush1.msra.mxu0 0.0
    %1462 = vmatprep.subr.mxu0 0.0
    %1463 = vmatpush1.msra.mxu0 0.0
    %1464 = vmatprep.subr.mxu0 0.0
    %1465 = vmatpush1.msra.mxu0 0.0
    %1466 = vmatprep.subr.mxu0 0.0
    %1467 = vmatpush1.msra.mxu0 0.0
    %1468 = vmatprep.subr.mxu0 0.0
    %1469 = vmatpush1.msra.mxu0 0.0
    %1470 = vmatprep.mubr.f32.mxu0 0.0
    %1471 = vmatmul.mubr.f32.gmra.mrb[0].mxu0 %v1404
    %v1472 = vpop.f32.mrb[0].mxu0
    %v1473 = vadd.f32 0.0, %v1472
    %v1474 = vpop.f32.mrb[0].mxu0
    %1475 = vdwg.mxu0
    %v1477 = vsel %vm179, %v1473, 0
    %1479 = vmatprep.subr.mxu0 0.0
    %1480 = vmatpush1.msra.mxu0 %v163
    %1481 = vmatprep.subr.mxu0 0.0
    %1482 = vmatpush1.msra.mxu0 %v164
    %1483 = vmatprep.subr.mxu0 0.0
    %1484 = vmatpush1.msra.mxu0 0.0
    %1485 = vmatprep.subr.mxu0 0.0
    %1486 = vmatpush1.msra.mxu0 0.0
    %1487 = vmatprep.subr.mxu0 0.0
    %1488 = vmatpush1.msra.mxu0 0.0
    %1489 = vmatprep.subr.mxu0 0.0
    %1490 = vmatpush1.msra.mxu0 0.0
    %1491 = vmatprep.subr.mxu0 0.0
    %1492 = vmatpush1.msra.mxu0 0.0
    %1493 = vmatprep.subr.mxu0 0.0
    %1494 = vmatpush1.msra.mxu0 0.0
    %1495 = vmatprep.subr.mxu0 0.0
    %1496 = vmatpush1.msra.mxu0 0.0
    %1497 = vmatprep.subr.mxu0 0.0
    %1498 = vmatpush1.msra.mxu0 0.0
    %1499 = vmatprep.subr.mxu0 0.0
    %1500 = vmatpush1.msra.mxu0 0.0
    %1501 = vmatprep.subr.mxu0 0.0
    %1502 = vmatpush1.msra.mxu0 0.0
    %1503 = vmatprep.subr.mxu0 0.0
    %1504 = vmatpush1.msra.mxu0 0.0
    %1505 = vmatprep.subr.mxu0 0.0
    %1506 = vmatpush1.msra.mxu0 0.0
    %1507 = vmatprep.subr.mxu0 0.0
    %1508 = vmatpush1.msra.mxu0 0.0
    %1509 = vmatprep.subr.mxu0 0.0
    %1510 = vmatpush1.msra.mxu0 0.0
    %1511 = vmatprep.subr.mxu0 0.0
    %1512 = vmatpush1.msra.mxu0 0.0
    %1513 = vmatprep.subr.mxu0 0.0
    %1514 = vmatpush1.msra.mxu0 0.0
    %1515 = vmatprep.subr.mxu0 0.0
    %1516 = vmatpush1.msra.mxu0 0.0
    %1517 = vmatprep.subr.mxu0 0.0
    %1518 = vmatpush1.msra.mxu0 0.0
    %1519 = vmatprep.subr.mxu0 0.0
    %1520 = vmatpush1.msra.mxu0 0.0
    %1521 = vmatprep.subr.mxu0 0.0
    %1522 = vmatpush1.msra.mxu0 0.0
    %1523 = vmatprep.subr.mxu0 0.0
    %1524 = vmatpush1.msra.mxu0 0.0
    %1525 = vmatprep.subr.mxu0 0.0
    %1526 = vmatpush1.msra.mxu0 0.0
    %1527 = vmatprep.subr.mxu0 0.0
    %1528 = vmatpush1.msra.mxu0 0.0
    %1529 = vmatprep.subr.mxu0 0.0
    %1530 = vmatpush1.msra.mxu0 0.0
    %1531 = vmatprep.subr.mxu0 0.0
    %1532 = vmatpush1.msra.mxu0 0.0
    %1533 = vmatprep.subr.mxu0 0.0
    %1534 = vmatpush1.msra.mxu0 0.0
    %1535 = vmatprep.subr.mxu0 0.0
    %1536 = vmatpush1.msra.mxu0 0.0
    %1537 = vmatprep.subr.mxu0 0.0
    %1538 = vmatpush1.msra.mxu0 0.0
    %1539 = vmatprep.subr.mxu0 0.0
    %1540 = vmatpush1.msra.mxu0 0.0
    %1541 = vmatprep.subr.mxu0 0.0
    %1542 = vmatpush1.msra.mxu0 0.0
    %1543 = vmatprep.mubr.f32.mxu0 0.0
    %1544 = vmatmul.mubr.f32.gmra.mrb[0].mxu0 %v1477
    %v1545 = vpop.f32.mrb[0].mxu0
    %v1546 = vadd.f32 0.0, %v1545
    %v1547 = vpop.f32.mrb[0].mxu0
    %1548 = vdwg.mxu0
    %v1550 = vsel %vm179, %v1305, 0
    %1552 = vmatprep.subr.mxu0 0.0
    %1553 = vmatpush1.msra.mxu0 %v161
    %1554 = vmatprep.subr.mxu0 0.0
    %1555 = vmatpush1.msra.mxu0 %v162
    %1556 = vmatprep.subr.mxu0 0.0
    %1557 = vmatpush1.msra.mxu0 0.0
    %1558 = vmatprep.subr.mxu0 0.0
    %1559 = vmatpush1.msra.mxu0 0.0
    %1560 = vmatprep.subr.mxu0 0.0
    %1561 = vmatpush1.msra.mxu0 0.0
    %1562 = vmatprep.subr.mxu0 0.0
    %1563 = vmatpush1.msra.mxu0 0.0
    %1564 = vmatprep.subr.mxu0 0.0
    %1565 = vmatpush1.msra.mxu0 0.0
    %1566 = vmatprep.subr.mxu0 0.0
    %1567 = vmatpush1.msra.mxu0 0.0
    %1568 = vmatprep.subr.mxu0 0.0
    %1569 = vmatpush1.msra.mxu0 0.0
    %1570 = vmatprep.subr.mxu0 0.0
    %1571 = vmatpush1.msra.mxu0 0.0
    %1572 = vmatprep.subr.mxu0 0.0
    %1573 = vmatpush1.msra.mxu0 0.0
    %1574 = vmatprep.subr.mxu0 0.0
    %1575 = vmatpush1.msra.mxu0 0.0
    %1576 = vmatprep.subr.mxu0 0.0
    %1577 = vmatpush1.msra.mxu0 0.0
    %1578 = vmatprep.subr.mxu0 0.0
    %1579 = vmatpush1.msra.mxu0 0.0
    %1580 = vmatprep.subr.mxu0 0.0
    %1581 = vmatpush1.msra.mxu0 0.0
    %1582 = vmatprep.subr.mxu0 0.0
    %1583 = vmatpush1.msra.mxu0 0.0
    %1584 = vmatprep.subr.mxu0 0.0
    %1585 = vmatpush1.msra.mxu0 0.0
    %1586 = vmatprep.subr.mxu0 0.0
    %1587 = vmatpush1.msra.mxu0 0.0
    %1588 = vmatprep.subr.mxu0 0.0
    %1589 = vmatpush1.msra.mxu0 0.0
    %1590 = vmatprep.subr.mxu0 0.0
    %1591 = vmatpush1.msra.mxu0 0.0
    %1592 = vmatprep.subr.mxu0 0.0
    %1593 = vmatpush1.msra.mxu0 0.0
    %1594 = vmatprep.subr.mxu0 0.0
    %1595 = vmatpush1.msra.mxu0 0.0
    %1596 = vmatprep.subr.mxu0 0.0
    %1597 = vmatpush1.msra.mxu0 0.0
    %1598 = vmatprep.subr.mxu0 0.0
    %1599 = vmatpush1.msra.mxu0 0.0
    %1600 = vmatprep.subr.mxu0 0.0
    %1601 = vmatpush1.msra.mxu0 0.0
    %1602 = vmatprep.subr.mxu0 0.0
    %1603 = vmatpush1.msra.mxu0 0.0
    %1604 = vmatprep.subr.mxu0 0.0
    %1605 = vmatpush1.msra.mxu0 0.0
    %1606 = vmatprep.subr.mxu0 0.0
    %1607 = vmatpush1.msra.mxu0 0.0
    %1608 = vmatprep.subr.mxu0 0.0
    %1609 = vmatpush1.msra.mxu0 0.0
    %1610 = vmatprep.subr.mxu0 0.0
    %1611 = vmatpush1.msra.mxu0 0.0
    %1612 = vmatprep.subr.mxu0 0.0
    %1613 = vmatpush1.msra.mxu0 0.0
    %1614 = vmatprep.subr.mxu0 0.0
    %1615 = vmatpush1.msra.mxu0 0.0
    %1616 = vmatprep.mubr.f32.mxu0 0.0
    %1617 = vmatmul.mubr.f32.gmra.mrb[0].mxu0 %v1550
    %v1618 = vpop.f32.mrb[0].mxu0
    %v1619 = vadd.f32 %v1546, %v1618
    %v1620 = vpop.f32.mrb[0].mxu0
    %1621 = vdwg.mxu0
    %1622 = vrot.lane.b32.xlu0 %v157, 96
    %v1623 = vpop.permute.xlu0 %1622
    %1624 = vrot.lane.b32.xlu0 %v157, 32
    %v1625 = vpop.permute.xlu0 %1624
    %v1626 = vsel %vm179, %v1623, 0
    %v1628 = vsel %vm179, %v1625, 0
    %1630 = vmatprep.subr.mxu0 0.0
    %1631 = vmatpush1.xpose.msra.mxu0 %v1628
    %1632 = vmatprep.subr.mxu0 0.0
    %1633 = vmatpush1.xpose.msra.mxu0 0.0
    %1634 = vmatprep.subr.mxu0 0.0
    %1635 = vmatpush1.xpose.msra.mxu0 0.0
    %1636 = vmatprep.subr.mxu0 0.0
    %1637 = vmatpush1.xpose.msra.mxu0 0.0
    %1638 = vmatprep.subr.mxu0 0.0
    %1639 = vmatpush1.xpose.msra.mxu0 0.0
    %1640 = vmatprep.subr.mxu0 0.0
    %1641 = vmatpush1.xpose.msra.mxu0 0.0
    %1642 = vmatprep.subr.mxu0 0.0
    %1643 = vmatpush1.xpose.msra.mxu0 0.0
    %1644 = vmatprep.subr.mxu0 0.0
    %1645 = vmatpush1.xpose.msra.mxu0 0.0
    %1646 = vmatprep.subr.mxu0 0.0
    %1647 = vmatpush1.xpose.msra.mxu0 0.0
    %1648 = vmatprep.subr.mxu0 0.0
    %1649 = vmatpush1.xpose.msra.mxu0 0.0
    %1650 = vmatprep.subr.mxu0 0.0
    %1651 = vmatpush1.xpose.msra.mxu0 0.0
    %1652 = vmatprep.subr.mxu0 0.0
    %1653 = vmatpush1.xpose.msra.mxu0 0.0
    %1654 = vmatprep.subr.mxu0 0.0
    %1655 = vmatpush1.xpose.msra.mxu0 0.0
    %1656 = vmatprep.subr.mxu0 0.0
    %1657 = vmatpush1.xpose.msra.mxu0 0.0
    %1658 = vmatprep.subr.mxu0 0.0
    %1659 = vmatpush1.xpose.msra.mxu0 0.0
    %1660 = vmatprep.subr.mxu0 0.0
    %1661 = vmatpush1.xpose.msra.mxu0 0.0
    %1662 = vmatprep.subr.mxu0 0.0
    %1663 = vmatpush1.xpose.msra.mxu0 0.0
    %1664 = vmatprep.subr.mxu0 0.0
    %1665 = vmatpush1.xpose.msra.mxu0 0.0
    %1666 = vmatprep.subr.mxu0 0.0
    %1667 = vmatpush1.xpose.msra.mxu0 0.0
    %1668 = vmatprep.subr.mxu0 0.0
    %1669 = vmatpush1.xpose.msra.mxu0 0.0
    %1670 = vmatprep.subr.mxu0 0.0
    %1671 = vmatpush1.xpose.msra.mxu0 0.0
    %1672 = vmatprep.subr.mxu0 0.0
    %1673 = vmatpush1.xpose.msra.mxu0 0.0
    %1674 = vmatprep.subr.mxu0 0.0
    %1675 = vmatpush1.xpose.msra.mxu0 0.0
    %1676 = vmatprep.subr.mxu0 0.0
    %1677 = vmatpush1.xpose.msra.mxu0 0.0
    %1678 = vmatprep.subr.mxu0 0.0
    %1679 = vmatpush1.xpose.msra.mxu0 0.0
    %1680 = vmatprep.subr.mxu0 0.0
    %1681 = vmatpush1.xpose.msra.mxu0 0.0
    %1682 = vmatprep.subr.mxu0 0.0
    %1683 = vmatpush1.xpose.msra.mxu0 0.0
    %1684 = vmatprep.subr.mxu0 0.0
    %1685 = vmatpush1.xpose.msra.mxu0 0.0
    %1686 = vmatprep.subr.mxu0 0.0
    %1687 = vmatpush1.xpose.msra.mxu0 0.0
    %1688 = vmatprep.subr.mxu0 0.0
    %1689 = vmatpush1.xpose.msra.mxu0 0.0
    %1690 = vmatprep.subr.mxu0 0.0
    %1691 = vmatpush1.xpose.msra.mxu0 0.0
    %1692 = vmatprep.subr.mxu0 0.0
    %1693 = vmatpush1.xpose.msra.mxu0 0.0
    %1694 = vmatprep.mubr.f32.mxu0 0.0
    %1695 = vmatmul.mubr.f32.gmra.mrb[0].mxu0 %v1626
    %v1696 = vpop.f32.mrb[0].mxu0
    %v1697 = vadd.f32 0.0, %v1696
    %v1698 = vpop.f32.mrb[0].mxu0
    %1699 = vdwg.mxu0
    %v1700 = vmul.f32 %v1697, 0.125
    %v1701 = vadd.f32 %v1700, %v175
    %v1702 = vsel %vm256, %v1701, -inf
    %1703 = vmax.xlane.f32.xlu0 %v1702
    %v1704 = vpop.xlane.xlu0 %1703
    %v1705 = vsub.f32 %v1701, %v1704
    %v1706 = vmul.f32 %v1705, 1.442695
    %v1707 = vpow.pop %v1706
    %v1708 = vsel %vm256, %v1707, 0.0
    %1709 = vadd.xlane.f32.xlu0 %v1708
    %v1710 = vpop.xlane.xlu0 %1709
    %v1711 = vrcp.pop %v1710
    %v1712 = vmul.f32 %v1707, %v1711
    %1713 = vrot.lane.b32.xlu0 %v159, 96
    %v1714 = vpop.permute.xlu0 %1713
    %v1717 = vsel %vm256, %v1712, 0
    %1719 = vmatprep.subr.mxu0 0.0
    %1720 = vmatpush1.msra.mxu0 %v1714
    %1721 = vmatprep.subr.mxu0 0.0
    %1722 = vmatpush1.msra.mxu0 0.0
    %1723 = vmatprep.subr.mxu0 0.0
    %1724 = vmatpush1.msra.mxu0 0.0
    %1725 = vmatprep.subr.mxu0 0.0
    %1726 = vmatpush1.msra.mxu0 0.0
    %1727 = vmatprep.subr.mxu0 0.0
    %1728 = vmatpush1.msra.mxu0 0.0
    %1729 = vmatprep.subr.mxu0 0.0
    %1730 = vmatpush1.msra.mxu0 0.0
    %1731 = vmatprep.subr.mxu0 0.0
    %1732 = vmatpush1.msra.mxu0 0.0
    %1733 = vmatprep.subr.mxu0 0.0
    %1734 = vmatpush1.msra.mxu0 0.0
    %1735 = vmatprep.subr.mxu0 0.0
    %1736 = vmatpush1.msra.mxu0 0.0
    %1737 = vmatprep.subr.mxu0 0.0
    %1738 = vmatpush1.msra.mxu0 0.0
    %1739 = vmatprep.subr.mxu0 0.0
    %1740 = vmatpush1.msra.mxu0 0.0
    %1741 = vmatprep.subr.mxu0 0.0
    %1742 = vmatpush1.msra.mxu0 0.0
    %1743 = vmatprep.subr.mxu0 0.0
    %1744 = vmatpush1.msra.mxu0 0.0
    %1745 = vmatprep.subr.mxu0 0.0
    %1746 = vmatpush1.msra.mxu0 0.0
    %1747 = vmatprep.subr.mxu0 0.0
    %1748 = vmatpush1.msra.mxu0 0.0
    %1749 = vmatprep.subr.mxu0 0.0
    %1750 = vmatpush1.msra.mxu0 0.0
    %1751 = vmatprep.subr.mxu0 0.0
    %1752 = vmatpush1.msra.mxu0 0.0
    %1753 = vmatprep.subr.mxu0 0.0
    %1754 = vmatpush1.msra.mxu0 0.0
    %1755 = vmatprep.subr.mxu0 0.0
    %1756 = vmatpush1.msra.mxu0 0.0
    %1757 = vmatprep.subr.mxu0 0.0
    %1758 = vmatpush1.msra.mxu0 0.0
    %1759 = vmatprep.subr.mxu0 0.0
    %1760 = vmatpush1.msra.mxu0 0.0
    %1761 = vmatprep.subr.mxu0 0.0
    %1762 = vmatpush1.msra.mxu0 0.0
    %1763 = vmatprep.subr.mxu0 0.0
    %1764 = vmatpush1.msra.mxu0 0.0
    %1765 = vmatprep.subr.mxu0 0.0
    %1766 = vmatpush1.msra.mxu0 0.0
    %1767 = vmatprep.subr.mxu0 0.0
    %1768 = vmatpush1.msra.mxu0 0.0
    %1769 = vmatprep.subr.mxu0 0.0
    %1770 = vmatpush1.msra.mxu0 0.0
    %1771 = vmatprep.subr.mxu0 0.0
    %1772 = vmatpush1.msra.mxu0 0.0
    %1773 = vmatprep.subr.mxu0 0.0
    %1774 = vmatpush1.msra.mxu0 0.0
    %1775 = vmatprep.subr.mxu0 0.0
    %1776 = vmatpush1.msra.mxu0 0.0
    %1777 = vmatprep.subr.mxu0 0.0
    %1778 = vmatpush1.msra.mxu0 0.0
    %1779 = vmatprep.subr.mxu0 0.0
    %1780 = vmatpush1.msra.mxu0 0.0
    %1781 = vmatprep.subr.mxu0 0.0
    %1782 = vmatpush1.msra.mxu0 0.0
    %1783 = vmatprep.mubr.f32.mxu0 0.0
    %1784 = vmatmul.mubr.f32.gmra.mrb[0].mxu0 %v1717
    %v1785 = vpop.f32.mrb[0].mxu0
    %v1786 = vadd.f32 0.0, %v1785
    %v1787 = vpop.f32.mrb[0].mxu0
    %1788 = vdwg.mxu0
    %v1790 = vsel %vm179, %v1786, 0
    %1792 = vmatprep.subr.mxu0 0.0
    %1793 = vmatpush1.msra.mxu0 %v165
    %1794 = vmatprep.subr.mxu0 0.0
    %1795 = vmatpush1.msra.mxu0 %v166
    %1796 = vmatprep.subr.mxu0 0.0
    %1797 = vmatpush1.msra.mxu0 0.0
    %1798 = vmatprep.subr.mxu0 0.0
    %1799 = vmatpush1.msra.mxu0 0.0
    %1800 = vmatprep.subr.mxu0 0.0
    %1801 = vmatpush1.msra.mxu0 0.0
    %1802 = vmatprep.subr.mxu0 0.0
    %1803 = vmatpush1.msra.mxu0 0.0
    %1804 = vmatprep.subr.mxu0 0.0
    %1805 = vmatpush1.msra.mxu0 0.0
    %1806 = vmatprep.subr.mxu0 0.0
    %1807 = vmatpush1.msra.mxu0 0.0
    %1808 = vmatprep.subr.mxu0 0.0
    %1809 = vmatpush1.msra.mxu0 0.0
    %1810 = vmatprep.subr.mxu0 0.0
    %1811 = vmatpush1.msra.mxu0 0.0
    %1812 = vmatprep.subr.mxu0 0.0
    %1813 = vmatpush1.msra.mxu0 0.0
    %1814 = vmatprep.subr.mxu0 0.0
    %1815 = vmatpush1.msra.mxu0 0.0
    %1816 = vmatprep.subr.mxu0 0.0
    %1817 = vmatpush1.msra.mxu0 0.0
    %1818 = vmatprep.subr.mxu0 0.0
    %1819 = vmatpush1.msra.mxu0 0.0
    %1820 = vmatprep.subr.mxu0 0.0
    %1821 = vmatpush1.msra.mxu0 0.0
    %1822 = vmatprep.subr.mxu0 0.0
    %1823 = vmatpush1.msra.mxu0 0.0
    %1824 = vmatprep.subr.mxu0 0.0
    %1825 = vmatpush1.msra.mxu0 0.0
    %1826 = vmatprep.subr.mxu0 0.0
    %1827 = vmatpush1.msra.mxu0 0.0
    %1828 = vmatprep.subr.mxu0 0.0
    %1829 = vmatpush1.msra.mxu0 0.0
    %1830 = vmatprep.subr.mxu0 0.0
    %1831 = vmatpush1.msra.mxu0 0.0
    %1832 = vmatprep.subr.mxu0 0.0
    %1833 = vmatpush1.msra.mxu0 0.0
    %1834 = vmatprep.subr.mxu0 0.0
    %1835 = vmatpush1.msra.mxu0 0.0
    %1836 = vmatprep.subr.mxu0 0.0
    %1837 = vmatpush1.msra.mxu0 0.0
    %1838 = vmatprep.subr.mxu0 0.0
    %1839 = vmatpush1.msra.mxu0 0.0
    %1840 = vmatprep.subr.mxu0 0.0
    %1841 = vmatpush1.msra.mxu0 0.0
    %1842 = vmatprep.subr.mxu0 0.0
    %1843 = vmatpush1.msra.mxu0 0.0
    %1844 = vmatprep.subr.mxu0 0.0
    %1845 = vmatpush1.msra.mxu0 0.0
    %1846 = vmatprep.subr.mxu0 0.0
    %1847 = vmatpush1.msra.mxu0 0.0
    %1848 = vmatprep.subr.mxu0 0.0
    %1849 = vmatpush1.msra.mxu0 0.0
    %1850 = vmatprep.subr.mxu0 0.0
    %1851 = vmatpush1.msra.mxu0 0.0
    %1852 = vmatprep.subr.mxu0 0.0
    %1853 = vmatpush1.msra.mxu0 0.0
    %1854 = vmatprep.subr.mxu0 0.0
    %1855 = vmatpush1.msra.mxu0 0.0
    %1856 = vmatprep.mubr.f32.mxu0 0.0
    %1857 = vmatmul.mubr.f32.gmra.mrb[0].mxu0 %v1790
    %v1858 = vpop.f32.mrb[0].mxu0
    %v1859 = vadd.f32 0.0, %v1858
    %v1860 = vpop.f32.mrb[0].mxu0
    %1861 = vdwg.mxu0
    %v1862 = vadd.f32 %v1619, %v1859
    %1863 = vrot.lane.b32.xlu0 %v157, 80
    %v1864 = vpop.permute.xlu0 %1863
    %1865 = vrot.lane.b32.xlu0 %v157, 16
    %v1866 = vpop.permute.xlu0 %1865
    %v1867 = vsel %vm179, %v1864, 0
    %v1869 = vsel %vm179, %v1866, 0
    %1871 = vmatprep.subr.mxu0 0.0
    %1872 = vmatpush1.xpose.msra.mxu0 %v1869
    %1873 = vmatprep.subr.mxu0 0.0
    %1874 = vmatpush1.xpose.msra.mxu0 0.0
    %1875 = vmatprep.subr.mxu0 0.0
    %1876 = vmatpush1.xpose.msra.mxu0 0.0
    %1877 = vmatprep.subr.mxu0 0.0
    %1878 = vmatpush1.xpose.msra.mxu0 0.0
    %1879 = vmatprep.subr.mxu0 0.0
    %1880 = vmatpush1.xpose.msra.mxu0 0.0
    %1881 = vmatprep.subr.mxu0 0.0
    %1882 = vmatpush1.xpose.msra.mxu0 0.0
    %1883 = vmatprep.subr.mxu0 0.0
    %1884 = vmatpush1.xpose.msra.mxu0 0.0
    %1885 = vmatprep.subr.mxu0 0.0
    %1886 = vmatpush1.xpose.msra.mxu0 0.0
    %1887 = vmatprep.subr.mxu0 0.0
    %1888 = vmatpush1.xpose.msra.mxu0 0.0
    %1889 = vmatprep.subr.mxu0 0.0
    %1890 = vmatpush1.xpose.msra.mxu0 0.0
    %1891 = vmatprep.subr.mxu0 0.0
    %1892 = vmatpush1.xpose.msra.mxu0 0.0
    %1893 = vmatprep.subr.mxu0 0.0
    %1894 = vmatpush1.xpose.msra.mxu0 0.0
    %1895 = vmatprep.subr.mxu0 0.0
    %1896 = vmatpush1.xpose.msra.mxu0 0.0
    %1897 = vmatprep.subr.mxu0 0.0
    %1898 = vmatpush1.xpose.msra.mxu0 0.0
    %1899 = vmatprep.subr.mxu0 0.0
    %1900 = vmatpush1.xpose.msra.mxu0 0.0
    %1901 = vmatprep.subr.mxu0 0.0
    %1902 = vmatpush1.xpose.msra.mxu0 0.0
    %1903 = vmatprep.subr.mxu0 0.0
    %1904 = vmatpush1.xpose.msra.mxu0 0.0
    %1905 = vmatprep.subr.mxu0 0.0
    %1906 = vmatpush1.xpose.msra.mxu0 0.0
    %1907 = vmatprep.subr.mxu0 0.0
    %1908 = vmatpush1.xpose.msra.mxu0 0.0
    %1909 = vmatprep.subr.mxu0 0.0
    %1910 = vmatpush1.xpose.msra.mxu0 0.0
    %1911 = vmatprep.subr.mxu0 0.0
    %1912 = vmatpush1.xpose.msra.mxu0 0.0
    %1913 = vmatprep.subr.mxu0 0.0
    %1914 = vmatpush1.xpose.msra.mxu0 0.0
    %1915 = vmatprep.subr.mxu0 0.0
    %1916 = vmatpush1.xpose.msra.mxu0 0.0
    %1917 = vmatprep.subr.mxu0 0.0
    %1918 = vmatpush1.xpose.msra.mxu0 0.0
    %1919 = vmatprep.subr.mxu0 0.0
    %1920 = vmatpush1.xpose.msra.mxu0 0.0
    %1921 = vmatprep.subr.mxu0 0.0
    %1922 = vmatpush1.xpose.msra.mxu0 0.0
    %1923 = vmatprep.subr.mxu0 0.0
    %1924 = vmatpush1.xpose.msra.mxu0 0.0
    %1925 = vmatprep.subr.mxu0 0.0
    %1926 = vmatpush1.xpose.msra.mxu0 0.0
    %1927 = vmatprep.subr.mxu0 0.0
    %1928 = vmatpush1.xpose.msra.mxu0 0.0
    %1929 = vmatprep.subr.mxu0 0.0
    %1930 = vmatpush1.xpose.msra.mxu0 0.0
    %1931 = vmatprep.subr.mxu0 0.0
    %1932 = vmatpush1.xpose.msra.mxu0 0.0
    %1933 = vmatprep.subr.mxu0 0.0
    %1934 = vmatpush1.xpose.msra.mxu0 0.0
    %1935 = vmatprep.mubr.f32.mxu0 0.0
    %1936 = vmatmul.mubr.f32.gmra.mrb[0].mxu0 %v1867
    %v1937 = vpop.f32.mrb[0].mxu0
    %v1938 = vadd.f32 0.0, %v1937
    %v1939 = vpop.f32.mrb[0].mxu0
    %1940 = vdwg.mxu0
    %v1941 = vmul.f32 %v1938, 0.125
    %v1942 = vadd.f32 %v1941, %v175
    %v1943 = vsel %vm256, %v1942, -inf
    %1944 = vmax.xlane.f32.xlu0 %v1943
    %v1945 = vpop.xlane.xlu0 %1944
    %v1946 = vsub.f32 %v1942, %v1945
    %v1947 = vmul.f32 %v1946, 1.442695
    %v1948 = vpow.pop %v1947
    %v1949 = vsel %vm256, %v1948, 0.0
    %1950 = vadd.xlane.f32.xlu0 %v1949
    %v1951 = vpop.xlane.xlu0 %1950
    %v1952 = vrcp.pop %v1951
    %v1953 = vmul.f32 %v1948, %v1952
    %1954 = vrot.lane.b32.xlu0 %v159, 80
    %v1955 = vpop.permute.xlu0 %1954
    %v1958 = vsel %vm256, %v1953, 0
    %1960 = vmatprep.subr.mxu0 0.0
    %1961 = vmatpush1.msra.mxu0 %v1955
    %1962 = vmatprep.subr.mxu0 0.0
    %1963 = vmatpush1.msra.mxu0 0.0
    %1964 = vmatprep.subr.mxu0 0.0
    %1965 = vmatpush1.msra.mxu0 0.0
    %1966 = vmatprep.subr.mxu0 0.0
    %1967 = vmatpush1.msra.mxu0 0.0
    %1968 = vmatprep.subr.mxu0 0.0
    %1969 = vmatpush1.msra.mxu0 0.0
    %1970 = vmatprep.subr.mxu0 0.0
    %1971 = vmatpush1.msra.mxu0 0.0
    %1972 = vmatprep.subr.mxu0 0.0
    %1973 = vmatpush1.msra.mxu0 0.0
    %1974 = vmatprep.subr.mxu0 0.0
    %1975 = vmatpush1.msra.mxu0 0.0
    %1976 = vmatprep.subr.mxu0 0.0
    %1977 = vmatpush1.msra.mxu0 0.0
    %1978 = vmatprep.subr.mxu0 0.0
    %1979 = vmatpush1.msra.mxu0 0.0
    %1980 = vmatprep.subr.mxu0 0.0
    %1981 = vmatpush1.msra.mxu0 0.0
    %1982 = vmatprep.subr.mxu0 0.0
    %1983 = vmatpush1.msra.mxu0 0.0
    %1984 = vmatprep.subr.mxu0 0.0
    %1985 = vmatpush1.msra.mxu0 0.0
    %1986 = vmatprep.subr.mxu0 0.0
    %1987 = vmatpush1.msra.mxu0 0.0
    %1988 = vmatprep.subr.mxu0 0.0
    %1989 = vmatpush1.msra.mxu0 0.0
    %1990 = vmatprep.subr.mxu0 0.0
    %1991 = vmatpush1.msra.mxu0 0.0
    %1992 = vmatprep.subr.mxu0 0.0
    %1993 = vmatpush1.msra.mxu0 0.0
    %1994 = vmatprep.subr.mxu0 0.0
    %1995 = vmatpush1.msra.mxu0 0.0
    %1996 = vmatprep.subr.mxu0 0.0
    %1997 = vmatpush1.msra.mxu0 0.0
    %1998 = vmatprep.subr.mxu0 0.0
    %1999 = vmatpush1.msra.mxu0 0.0
    %2000 = vmatprep.subr.mxu0 0.0
    %2001 = vmatpush1.msra.mxu0 0.0
    %2002 = vmatprep.subr.mxu0 0.0
    %2003 = vmatpush1.msra.mxu0 0.0
    %2004 = vmatprep.subr.mxu0 0.0
    %2005 = vmatpush1.msra.mxu0 0.0
    %2006 = vmatprep.subr.mxu0 0.0
    %2007 = vmatpush1.msra.mxu0 0.0
    %2008 = vmatprep.subr.mxu0 0.0
    %2009 = vmatpush1.msra.mxu0 0.0
    %2010 = vmatprep.subr.mxu0 0.0
    %2011 = vmatpush1.msra.mxu0 0.0
    %2012 = vmatprep.subr.mxu0 0.0
    %2013 = vmatpush1.msra.mxu0 0.0
    %2014 = vmatprep.subr.mxu0 0.0
    %2015 = vmatpush1.msra.mxu0 0.0
    %2016 = vmatprep.subr.mxu0 0.0
    %2017 = vmatpush1.msra.mxu0 0.0
    %2018 = vmatprep.subr.mxu0 0.0
    %2019 = vmatpush1.msra.mxu0 0.0
    %2020 = vmatprep.subr.mxu0 0.0
    %2021 = vmatpush1.msra.mxu0 0.0
    %2022 = vmatprep.subr.mxu0 0.0
    %2023 = vmatpush1.msra.mxu0 0.0
    %2024 = vmatprep.mubr.f32.mxu0 0.0
    %2025 = vmatmul.mubr.f32.gmra.mrb[0].mxu0 %v1958
    %v2026 = vpop.f32.mrb[0].mxu0
    %v2027 = vadd.f32 0.0, %v2026
    %v2028 = vpop.f32.mrb[0].mxu0
    %2029 = vdwg.mxu0
    %v2031 = vsel %vm179, %v2027, 0
    %2033 = vmatprep.subr.mxu0 0.0
    %2034 = vmatpush1.msra.mxu0 %v167
    %2035 = vmatprep.subr.mxu0 0.0
    %2036 = vmatpush1.msra.mxu0 %v168
    %2037 = vmatprep.subr.mxu0 0.0
    %2038 = vmatpush1.msra.mxu0 0.0
    %2039 = vmatprep.subr.mxu0 0.0
    %2040 = vmatpush1.msra.mxu0 0.0
    %2041 = vmatprep.subr.mxu0 0.0
    %2042 = vmatpush1.msra.mxu0 0.0
    %2043 = vmatprep.subr.mxu0 0.0
    %2044 = vmatpush1.msra.mxu0 0.0
    %2045 = vmatprep.subr.mxu0 0.0
    %2046 = vmatpush1.msra.mxu0 0.0
    %2047 = vmatprep.subr.mxu0 0.0
    %2048 = vmatpush1.msra.mxu0 0.0
    %2049 = vmatprep.subr.mxu0 0.0
    %2050 = vmatpush1.msra.mxu0 0.0
    %2051 = vmatprep.subr.mxu0 0.0
    %2052 = vmatpush1.msra.mxu0 0.0
    %2053 = vmatprep.subr.mxu0 0.0
    %2054 = vmatpush1.msra.mxu0 0.0
    %2055 = vmatprep.subr.mxu0 0.0
    %2056 = vmatpush1.msra.mxu0 0.0
    %2057 = vmatprep.subr.mxu0 0.0
    %2058 = vmatpush1.msra.mxu0 0.0
    %2059 = vmatprep.subr.mxu0 0.0
    %2060 = vmatpush1.msra.mxu0 0.0
    %2061 = vmatprep.subr.mxu0 0.0
    %2062 = vmatpush1.msra.mxu0 0.0
    %2063 = vmatprep.subr.mxu0 0.0
    %2064 = vmatpush1.msra.mxu0 0.0
    %2065 = vmatprep.subr.mxu0 0.0
    %2066 = vmatpush1.msra.mxu0 0.0
    %2067 = vmatprep.subr.mxu0 0.0
    %2068 = vmatpush1.msra.mxu0 0.0
    %2069 = vmatprep.subr.mxu0 0.0
    %2070 = vmatpush1.msra.mxu0 0.0
    %2071 = vmatprep.subr.mxu0 0.0
    %2072 = vmatpush1.msra.mxu0 0.0
    %2073 = vmatprep.subr.mxu0 0.0
    %2074 = vmatpush1.msra.mxu0 0.0
    %2075 = vmatprep.subr.mxu0 0.0
    %2076 = vmatpush1.msra.mxu0 0.0
    %2077 = vmatprep.subr.mxu0 0.0
    %2078 = vmatpush1.msra.mxu0 0.0
    %2079 = vmatprep.subr.mxu0 0.0
    %2080 = vmatpush1.msra.mxu0 0.0
    %2081 = vmatprep.subr.mxu0 0.0
    %2082 = vmatpush1.msra.mxu0 0.0
    %2083 = vmatprep.subr.mxu0 0.0
    %2084 = vmatpush1.msra.mxu0 0.0
    %2085 = vmatprep.subr.mxu0 0.0
    %2086 = vmatpush1.msra.mxu0 0.0
    %2087 = vmatprep.subr.mxu0 0.0
    %2088 = vmatpush1.msra.mxu0 0.0
    %2089 = vmatprep.subr.mxu0 0.0
    %2090 = vmatpush1.msra.mxu0 0.0
    %2091 = vmatprep.subr.mxu0 0.0
    %2092 = vmatpush1.msra.mxu0 0.0
    %2093 = vmatprep.subr.mxu0 0.0
    %2094 = vmatpush1.msra.mxu0 0.0
    %2095 = vmatprep.subr.mxu0 0.0
    %2096 = vmatpush1.msra.mxu0 0.0
    %2097 = vmatprep.mubr.f32.mxu0 0.0
    %2098 = vmatmul.mubr.f32.gmra.mrb[0].mxu0 %v2031
    %v2099 = vpop.f32.mrb[0].mxu0
    %v2100 = vadd.f32 0.0, %v2099
    %v2101 = vpop.f32.mrb[0].mxu0
    %2102 = vdwg.mxu0
    %v2103 = vadd.f32 %v1862, %v2100
    %v2104 = vadd.f32 %v2103, %v1141
    %2105 = vst [vmem:[#allocation8 + $0x8] sm:$0xff] %v2104
    // Predicated region
    $region30: #{tpu_custom_call.1} parent=1 // pred_check
      _
    $region31: #{tpu_custom_call.1} parent=1 // pred_check_branch
      %2107 = sbr.rel (0) target = $region33
    $region32: #{tpu_custom_call.1} parent=1 // pred_region
      %s2109 = ssub.s32 256, 256
      %2110 = vsyncadd [#allocation4], %s2109
      %s2111 = sshll.u32 [#allocation8], 4
      %s2112 = int_to_ptr.vmem [resolvable:$true] %s2111
      %2117 = dma.vmem_to_hbm [thread:$0]  %s2112, 256, %s4, [#allocation4], 128, 128, 8
    $region33: #{tpu_custom_call.1} parent=1 // pred_fallthru
      _
    // Predicated region
    $region34: #{tpu_custom_call.1} parent=1 // pred_check
      _
    $region35: #{tpu_custom_call.1} parent=1 // pred_check_branch
      %2119 = sbr.rel (0) target = $region37
    $region36: #{tpu_custom_call.1} parent=1 // pred_region
      %2120 = dma.done [#allocation4], 256
    $region37: #{tpu_custom_call.1} parent=1 // pred_fallthru
      _
    %2121 = vsyncpa [#allocation3], 1
    %2122 = vsyncpa [#allocation6], 1
    %2123 = vsyncpa [#allocation4], 1

</llo_original>
